<compile_context>
chip_gen: v6e
topology: v6e:2x2x1
jax: 0.10.0
libtpu: 0.0.40
codegen_flags: <defaults>
</compile_context>

<pallas_src>
import functools

import jax
import jax.numpy as jnp
from jax.experimental import pallas as pl
from jax.experimental.pallas import tpu as pltpu


def _pair(x):
    if isinstance(x, (tuple, list)):
        return tuple(x)
    return (x, x)


def _same_padding(kernel_size, dilation):
    """Reproduce Conv2dSame._reversed_padding_repeated_twice as per-dim pads."""
    kh, kw = _pair(kernel_size)
    dh, dw = _pair(dilation)
    out = []
    for d, k in ((dh, kh), (dw, kw)):
        total = d * (k - 1)
        left = total // 2
        out.append((left, total - left))
    return tuple(out)  # ((ph_l, ph_r), (pw_l, pw_r))


def _round_up(x, m):
    return ((x + m - 1) // m) * m


def _conv_same_kernel(x_ref, w_ref, b_ref, o_ref, pad_ref, *,
                      nb, cin, hw, kh_kw, dilation, wp, ph_l, pw_l,
                      img_stride, lanes, cdtype):
    """One batch-chunk (`nb` images) per grid step.

    x_ref  : (nb, Cin, H*W)         raw image, spatial flattened on lanes
    w_ref  : (KH*KW, Cout, Cinp)    per-tap weight blocks (Cin zero-padded)
    b_ref  : (Cout, 1)              f32 bias
    o_ref  : (nb, Cout, S)          lane-dense wide output (S = img_stride)
    pad_ref: (Cinp, FLAT)           zero-padded image slabs, stride S per image
    """
    KH, KW = kh_kw
    dh, dw = dilation
    H, W = hw
    cout = o_ref.shape[1]

    # Rebuild the zero-padded slab every step: border / pad-channel / tail
    # lanes stay zero, interior rows are overwritten below.  A few vreg
    # stores, and it keeps every grid step fully independent (megacore-safe).
    pad_ref[...] = jnp.zeros_like(pad_ref)

    for b in range(nb):
        base = b * img_stride
        for h in range(H):
            dst = base + (ph_l + h) * wp + pw_l
            pad_ref[:cin, pl.ds(dst, W)] = (
                x_ref[b, :, pl.ds(h * W, W)].astype(cdtype))

    # Direct per-tap MXU accumulation (no im2col scratch, no masked tap
    # stores): each tap is one (Cout, Cinp) @ (Cinp, LANES) matmul, f32 acc.
    acc = jnp.zeros((cout, lanes), dtype=jnp.float32)
    for kh in range(KH):
        for kw in range(KW):
            tap = kh * KW + kw
            off = kh * dh * wp + kw * dw
            x_tap = pad_ref[:, pl.ds(off, lanes)]          # (Cinp, LANES)
            acc = acc + jnp.dot(w_ref[tap], x_tap,
                                preferred_element_type=jnp.float32)
    acc = acc + b_ref[...]                                 # (Cout, 1) broadcast

    # Per-image 128-aligned dense slices -> unmasked lane-dense stores.
    for b in range(nb):
        o_ref[b] = acc[:, b * img_stride:(b + 1) * img_stride].astype(o_ref.dtype)


def conv2d_same(imgs_nchw, weight_oihw, bias, *, stride=1, dilation=1,
                compute_dtype=None):
    """Conv2dSame.forward: NCHW in, NCHW out, stride=1, 'same' spatial dims."""
    sh, sw = _pair(stride)
    # TODO(synk): stride > 1 not implemented; Conv2dSame defaults to stride=1.
    assert sh == 1 and sw == 1, "stride > 1 is not implemented"

    N, Cin, H, W = imgs_nchw.shape
    Cout, Cin_w, KH, KW = weight_oihw.shape
    assert Cin == Cin_w, "grouped conv not supported"
    dh, dw = _pair(dilation)
    (ph_l, ph_r), (pw_l, pw_r) = _same_padding((KH, KW), (dh, dw))
    Hp = H + ph_l + ph_r
    Wp = W + pw_l + pw_r
    del Hp, ph_r, pw_r  # implied by off_max below

    cdtype = jnp.dtype(compute_dtype) if compute_dtype is not None \
        else jnp.dtype(imgs_nchw.dtype)
    # Full sublane tile for tap operands: 8 for f32, 16 for bf16, ...
    sub = max(8, 8 * 4 // cdtype.itemsize)
    Cinp = _round_up(Cin, sub)

    # Per-image slab / output stride (lane-aligned).  Taps for valid output
    # columns read at most `off_max` lanes past that image's H*Wp output
    # columns, so they never bleed into the next image's real data.
    off_max = (KH - 1) * dh * Wp + (KW - 1) * dw
    S = _round_up(H * Wp + off_max, 128)

    # Fold small batches into one grid step (amortize ~0.35 us/step and feed
    # the MXU a longer lane axis).
    max_lanes = 2048
    NB = 1
    for cand in range(N, 0, -1):
        if N % cand == 0 and cand * S <= max_lanes:
            NB = cand
            break
    lanes = NB * S
    flat = lanes + (_round_up(off_max, 128) if off_max > 0 else 0)

    # NCHW end to end, no padding / cast pre-pass in HBM (free reshape only).
    x_flat = imgs_nchw.reshape(N, Cin, H * W)

    # Per-tap weight blocks (KH*KW, Cout, Cinp); channel axis zero-padded so
    # every tap matmul uses full-sublane operands.
    w_tap = jnp.transpose(weight_oihw, (2, 3, 0, 1)).reshape(KH * KW, Cout, Cin)
    if Cinp != Cin:
        w_tap = jnp.pad(w_tap, ((0, 0), (0, 0), (0, Cinp - Cin)))
    w_tap = w_tap.astype(cdtype)
    b2d = bias.reshape(Cout, 1).astype(jnp.float32)

    kernel = functools.partial(
        _conv_same_kernel, nb=NB, cin=Cin, hw=(H, W), kh_kw=(KH, KW),
        dilation=(dh, dw), wp=Wp, ph_l=ph_l, pw_l=pw_l,
        img_stride=S, lanes=lanes, cdtype=cdtype)

    in_isz = jnp.dtype(imgs_nchw.dtype).itemsize
    cost = pl.CostEstimate(
        flops=2 * N * H * W * KH * KW * Cin * Cout,
        transcendentals=0,
        bytes_accessed=(x_flat.size * in_isz + w_tap.size * cdtype.itemsize
                        + b2d.size * 4 + N * Cout * S * in_isz))

    # Derive the VMEM budget from the actual blocks (review: don't hard-code).
    block_bytes = (NB * Cin * H * W * in_isz      # input block
                   + NB * Cout * S * in_isz       # output block
                   + w_tap.size * cdtype.itemsize + b2d.size * 4)
    scratch_bytes = Cinp * flat * cdtype.itemsize
    need = 2 * block_bytes + scratch_bytes        # double-buffered blocks
    try:
        vmem_cap = pltpu.get_tpu_info().vmem_capacity_bytes
    except Exception:
        vmem_cap = 64 * 1024 * 1024
    vmem_limit = int(min(max(4 * need, 32 * 1024 * 1024), int(0.9 * vmem_cap)))

    out_wide = pl.pallas_call(
        kernel,
        out_shape=jax.ShapeDtypeStruct((N, Cout, S), imgs_nchw.dtype),
        grid_spec=pltpu.PrefetchScalarGridSpec(
            num_scalar_prefetch=0,
            grid=(N // NB,),
            in_specs=[
                pl.BlockSpec((NB, Cin, H * W), lambda g: (g, 0, 0)),
                pl.BlockSpec((KH * KW, Cout, Cinp), lambda g: (0, 0, 0)),
                pl.BlockSpec((Cout, 1), lambda g: (0, 0)),
            ],
            out_specs=pl.BlockSpec((NB, Cout, S), lambda g: (g, 0, 0)),
            scratch_shapes=[pltpu.VMEM((Cinp, flat), cdtype)],
        ),
        compiler_params=pltpu.CompilerParams(
            dimension_semantics=("parallel",),
            vmem_limit_bytes=vmem_limit),
        cost_estimate=cost,
    )(x_flat, w_tap, b2d)

    # Per-image wide layout is (h, w_padded); crop the junk columns
    # w in [W, Wp) and the aligned tail [H*Wp, S).  Result is already NCHW.
    return out_wide[:, :, :H * Wp].reshape(N, Cout, H, Wp)[:, :, :, :W]


if __name__ == "__main__":
    # Module config (synthetic, deterministic init).
    in_channels, out_channels, kernel_size = 4, 8, 3
    N, H, W = 2, 16, 16

    key = jax.random.PRNGKey(0)
    kx, kw_, kb = jax.random.split(key, 3)

    x = jax.random.normal(kx, (N, in_channels, H, W), dtype=jnp.float32)
    # PyTorch Conv2d weight layout: (Cout, Cin, KH, KW); bias: (Cout,)
    weight = jax.random.normal(
        kw_, (out_channels, in_channels, kernel_size, kernel_size),
        dtype=jnp.float32) * 0.1
    bias = jax.random.normal(kb, (out_channels,), dtype=jnp.float32) * 0.1

    (ph, _), (pw, _) = _same_padding(kernel_size, 1)

    # f32 path vs XLA conv with the same explicit 'same' padding.
    out = conv2d_same(x, weight, bias, dilation=1)
    out = jax.block_until_ready(out)
    ref = jax.lax.conv_general_dilated(
        x, weight, window_strides=(1, 1), padding=((ph, ph), (pw, pw)),
        dimension_numbers=("NCHW", "OIHW", "NCHW"),
        precision=jax.lax.Precision.HIGHEST,
    ) + bias.reshape(1, out_channels, 1, 1)
    assert out.shape == (N, out_channels, H, W)
    assert jnp.allclose(out, ref, atol=2e-2, rtol=2e-2)

    # bf16 matmul path (f32 accumulation) vs a bf16-input XLA reference.
    out_bf16 = conv2d_same(x, weight, bias, dilation=1,
                           compute_dtype=jnp.bfloat16)
    out_bf16 = jax.block_until_ready(out_bf16)
    ref_bf16 = jax.lax.conv_general_dilated(
        x.astype(jnp.bfloat16), weight.astype(jnp.bfloat16),
        window_strides=(1, 1), padding=((ph, ph), (pw, pw)),
        dimension_numbers=("NCHW", "OIHW", "NCHW"),
        preferred_element_type=jnp.float32,
    ) + bias.reshape(1, out_channels, 1, 1)
    assert jnp.allclose(out_bf16, ref_bf16, atol=2e-2, rtol=2e-2)

    print("KERNEL_OK")
</pallas_src>

<mosaic_0001>
module attributes {stable_mosaic.version = 11 : i64} {
  func.func @_conv_same_kernel(%arg0: i32, %arg1: memref<2x4x256xf32, #tpu.memory_space<vmem>>, %arg2: memref<9x8x8xf32, #tpu.memory_space<vmem>>, %arg3: memref<8x1xf32, #tpu.memory_space<vmem>>, %arg4: memref<2x8x384xf32, #tpu.memory_space<vmem>>, %arg5: memref<8x896xf32, #tpu.memory_space<vmem>>) attributes {dimension_semantics = [#tpu.dimension_semantics<parallel>], iteration_bounds = array<i64: 1>, scalar_prefetch = 0 : i64, scratch_operands = 1 : i64, tpu.core_type = #tpu.core_type<tc>, window_params = [{transform_indices = @transform_0, window_bounds = array<i64: 2, 4, 256>}, {pipeline_mode = #tpu.pipeline_mode<synchronous>, transform_indices = @transform_1, window_bounds = array<i64: 9, 8, 8>}, {pipeline_mode = #tpu.pipeline_mode<synchronous>, transform_indices = @transform_2, window_bounds = array<i64: 8, 1>}, {transform_indices = @transform_3, window_bounds = array<i64: 2, 8, 384>}]} {
    %cst = arith.constant 0.000000e+00 : f32
    %0 = vector.broadcast %cst : f32 to vector<8x896xf32>
    %c0 = arith.constant 0 : index
    %c0_0 = arith.constant 0 : index
    %1 = vector.load %arg5[%c0, %c0_0] : memref<8x896xf32, #tpu.memory_space<vmem>>, vector<8x896xf32>
    tpu.vector_store %arg5[%c0, %c0_0], %0 {strides = array<i32>} : memref<8x896xf32, #tpu.memory_space<vmem>>, vector<8x896xf32>,
    %c0_1 = arith.constant 0 : index
    %c0_2 = arith.constant 0 : index
    %c0_3 = arith.constant 0 : index
    %2 = vector.load %arg1[%c0_1, %c0_2, %c0_3] : memref<2x4x256xf32, #tpu.memory_space<vmem>>, vector<1x4x16xf32>
    %3 = vector.shape_cast %2 : vector<1x4x16xf32> to vector<4x16xf32>
    %c0_4 = arith.constant 0 : index
    %c19 = arith.constant 19 : index
    %4 = vector.load %arg5[%c0_4, %c19] : memref<8x896xf32, #tpu.memory_space<vmem>>, vector<4x16xf32>
    tpu.vector_store %arg5[%c0_4, %c19], %3 {strides = array<i32>} : memref<8x896xf32, #tpu.memory_space<vmem>>, vector<4x16xf32>,
    %c0_5 = arith.constant 0 : index
    %c0_6 = arith.constant 0 : index
    %c16 = arith.constant 16 : index
    %5 = vector.load %arg1[%c0_5, %c0_6, %c16] : memref<2x4x256xf32, #tpu.memory_space<vmem>>, vector<1x4x16xf32>
    %6 = vector.shape_cast %5 : vector<1x4x16xf32> to vector<4x16xf32>
    %c0_7 = arith.constant 0 : index
    %c37 = arith.constant 37 : index
    %7 = vector.load %arg5[%c0_7, %c37] : memref<8x896xf32, #tpu.memory_space<vmem>>, vector<4x16xf32>
    tpu.vector_store %arg5[%c0_7, %c37], %6 {strides = array<i32>} : memref<8x896xf32, #tpu.memory_space<vmem>>, vector<4x16xf32>,
    %c0_8 = arith.constant 0 : index
    %c0_9 = arith.constant 0 : index
    %c32 = arith.constant 32 : index
    %8 = vector.load %arg1[%c0_8, %c0_9, %c32] : memref<2x4x256xf32, #tpu.memory_space<vmem>>, vector<1x4x16xf32>
    %9 = vector.shape_cast %8 : vector<1x4x16xf32> to vector<4x16xf32>
    %c0_10 = arith.constant 0 : index
    %c55 = arith.constant 55 : index
    %10 = vector.load %arg5[%c0_10, %c55] : memref<8x896xf32, #tpu.memory_space<vmem>>, vector<4x16xf32>
    tpu.vector_store %arg5[%c0_10, %c55], %9 {strides = array<i32>} : memref<8x896xf32, #tpu.memory_space<vmem>>, vector<4x16xf32>,
    %c0_11 = arith.constant 0 : index
    %c0_12 = arith.constant 0 : index
    %c48 = arith.constant 48 : index
    %11 = vector.load %arg1[%c0_11, %c0_12, %c48] : memref<2x4x256xf32, #tpu.memory_space<vmem>>, vector<1x4x16xf32>
    %12 = vector.shape_cast %11 : vector<1x4x16xf32> to vector<4x16xf32>
    %c0_13 = arith.constant 0 : index
    %c73 = arith.constant 73 : index
    %13 = vector.load %arg5[%c0_13, %c73] : memref<8x896xf32, #tpu.memory_space<vmem>>, vector<4x16xf32>
    tpu.vector_store %arg5[%c0_13, %c73], %12 {strides = array<i32>} : memref<8x896xf32, #tpu.memory_space<vmem>>, vector<4x16xf32>,
    %c0_14 = arith.constant 0 : index
    %c0_15 = arith.constant 0 : index
    %c64 = arith.constant 64 : index
    %14 = vector.load %arg1[%c0_14, %c0_15, %c64] : memref<2x4x256xf32, #tpu.memory_space<vmem>>, vector<1x4x16xf32>
    %15 = vector.shape_cast %14 : vector<1x4x16xf32> to vector<4x16xf32>
    %c0_16 = arith.constant 0 : index
    %c91 = arith.constant 91 : index
    %16 = vector.load %arg5[%c0_16, %c91] : memref<8x896xf32, #tpu.memory_space<vmem>>, vector<4x16xf32>
    tpu.vector_store %arg5[%c0_16, %c91], %15 {strides = array<i32>} : memref<8x896xf32, #tpu.memory_space<vmem>>, vector<4x16xf32>,
    %c0_17 = arith.constant 0 : index
    %c0_18 = arith.constant 0 : index
    %c80 = arith.constant 80 : index
    %17 = vector.load %arg1[%c0_17, %c0_18, %c80] : memref<2x4x256xf32, #tpu.memory_space<vmem>>, vector<1x4x16xf32>
    %18 = vector.shape_cast %17 : vector<1x4x16xf32> to vector<4x16xf32>
    %c0_19 = arith.constant 0 : index
    %c109 = arith.constant 109 : index
    %19 = vector.load %arg5[%c0_19, %c109] : memref<8x896xf32, #tpu.memory_space<vmem>>, vector<4x16xf32>
    tpu.vector_store %arg5[%c0_19, %c109], %18 {strides = array<i32>} : memref<8x896xf32, #tpu.memory_space<vmem>>, vector<4x16xf32>,
    %c0_20 = arith.constant 0 : index
    %c0_21 = arith.constant 0 : index
    %c96 = arith.constant 96 : index
    %20 = vector.load %arg1[%c0_20, %c0_21, %c96] : memref<2x4x256xf32, #tpu.memory_space<vmem>>, vector<1x4x16xf32>
    %21 = vector.shape_cast %20 : vector<1x4x16xf32> to vector<4x16xf32>
    %c0_22 = arith.constant 0 : index
    %c127 = arith.constant 127 : index
    %22 = vector.load %arg5[%c0_22, %c127] : memref<8x896xf32, #tpu.memory_space<vmem>>, vector<4x16xf32>
    tpu.vector_store %arg5[%c0_22, %c127], %21 {strides = array<i32>} : memref<8x896xf32, #tpu.memory_space<vmem>>, vector<4x16xf32>,
    %c0_23 = arith.constant 0 : index
    %c0_24 = arith.constant 0 : index
    %c112 = arith.constant 112 : index
    %23 = vector.load %arg1[%c0_23, %c0_24, %c112] : memref<2x4x256xf32, #tpu.memory_space<vmem>>, vector<1x4x16xf32>
    %24 = vector.shape_cast %23 : vector<1x4x16xf32> to vector<4x16xf32>
    %c0_25 = arith.constant 0 : index
    %c145 = arith.constant 145 : index
    %25 = vector.load %arg5[%c0_25, %c145] : memref<8x896xf32, #tpu.memory_space<vmem>>, vector<4x16xf32>
    tpu.vector_store %arg5[%c0_25, %c145], %24 {strides = array<i32>} : memref<8x896xf32, #tpu.memory_space<vmem>>, vector<4x16xf32>,
    %c0_26 = arith.constant 0 : index
    %c0_27 = arith.constant 0 : index
    %c128 = arith.constant 128 : index
    %26 = vector.load %arg1[%c0_26, %c0_27, %c128] : memref<2x4x256xf32, #tpu.memory_space<vmem>>, vector<1x4x16xf32>
    %27 = vector.shape_cast %26 : vector<1x4x16xf32> to vector<4x16xf32>
    %c0_28 = arith.constant 0 : index
    %c163 = arith.constant 163 : index
    %28 = vector.load %arg5[%c0_28, %c163] : memref<8x896xf32, #tpu.memory_space<vmem>>, vector<4x16xf32>
    tpu.vector_store %arg5[%c0_28, %c163], %27 {strides = array<i32>} : memref<8x896xf32, #tpu.memory_space<vmem>>, vector<4x16xf32>,
    %c0_29 = arith.constant 0 : index
    %c0_30 = arith.constant 0 : index
    %c144 = arith.constant 144 : index
    %29 = vector.load %arg1[%c0_29, %c0_30, %c144] : memref<2x4x256xf32, #tpu.memory_space<vmem>>, vector<1x4x16xf32>
    %30 = vector.shape_cast %29 : vector<1x4x16xf32> to vector<4x16xf32>
    %c0_31 = arith.constant 0 : index
    %c181 = arith.constant 181 : index
    %31 = vector.load %arg5[%c0_31, %c181] : memref<8x896xf32, #tpu.memory_space<vmem>>, vector<4x16xf32>
    tpu.vector_store %arg5[%c0_31, %c181], %30 {strides = array<i32>} : memref<8x896xf32, #tpu.memory_space<vmem>>, vector<4x16xf32>,
    %c0_32 = arith.constant 0 : index
    %c0_33 = arith.constant 0 : index
    %c160 = arith.constant 160 : index
    %32 = vector.load %arg1[%c0_32, %c0_33, %c160] : memref<2x4x256xf32, #tpu.memory_space<vmem>>, vector<1x4x16xf32>
    %33 = vector.shape_cast %32 : vector<1x4x16xf32> to vector<4x16xf32>
    %c0_34 = arith.constant 0 : index
    %c199 = arith.constant 199 : index
    %34 = vector.load %arg5[%c0_34, %c199] : memref<8x896xf32, #tpu.memory_space<vmem>>, vector<4x16xf32>
    tpu.vector_store %arg5[%c0_34, %c199], %33 {strides = array<i32>} : memref<8x896xf32, #tpu.memory_space<vmem>>, vector<4x16xf32>,
    %c0_35 = arith.constant 0 : index
    %c0_36 = arith.constant 0 : index
    %c176 = arith.constant 176 : index
    %35 = vector.load %arg1[%c0_35, %c0_36, %c176] : memref<2x4x256xf32, #tpu.memory_space<vmem>>, vector<1x4x16xf32>
    %36 = vector.shape_cast %35 : vector<1x4x16xf32> to vector<4x16xf32>
    %c0_37 = arith.constant 0 : index
    %c217 = arith.constant 217 : index
    %37 = vector.load %arg5[%c0_37, %c217] : memref<8x896xf32, #tpu.memory_space<vmem>>, vector<4x16xf32>
    tpu.vector_store %arg5[%c0_37, %c217], %36 {strides = array<i32>} : memref<8x896xf32, #tpu.memory_space<vmem>>, vector<4x16xf32>,
    %c0_38 = arith.constant 0 : index
    %c0_39 = arith.constant 0 : index
    %c192 = arith.constant 192 : index
    %38 = vector.load %arg1[%c0_38, %c0_39, %c192] : memref<2x4x256xf32, #tpu.memory_space<vmem>>, vector<1x4x16xf32>
    %39 = vector.shape_cast %38 : vector<1x4x16xf32> to vector<4x16xf32>
    %c0_40 = arith.constant 0 : index
    %c235 = arith.constant 235 : index
    %40 = vector.load %arg5[%c0_40, %c235] : memref<8x896xf32, #tpu.memory_space<vmem>>, vector<4x16xf32>
    tpu.vector_store %arg5[%c0_40, %c235], %39 {strides = array<i32>} : memref<8x896xf32, #tpu.memory_space<vmem>>, vector<4x16xf32>,
    %c0_41 = arith.constant 0 : index
    %c0_42 = arith.constant 0 : index
    %c208 = arith.constant 208 : index
    %41 = vector.load %arg1[%c0_41, %c0_42, %c208] : memref<2x4x256xf32, #tpu.memory_space<vmem>>, vector<1x4x16xf32>
    %42 = vector.shape_cast %41 : vector<1x4x16xf32> to vector<4x16xf32>
    %c0_43 = arith.constant 0 : index
    %c253 = arith.constant 253 : index
    %43 = vector.load %arg5[%c0_43, %c253] : memref<8x896xf32, #tpu.memory_space<vmem>>, vector<4x16xf32>
    tpu.vector_store %arg5[%c0_43, %c253], %42 {strides = array<i32>} : memref<8x896xf32, #tpu.memory_space<vmem>>, vector<4x16xf32>,
    %c0_44 = arith.constant 0 : index
    %c0_45 = arith.constant 0 : index
    %c224 = arith.constant 224 : index
    %44 = vector.load %arg1[%c0_44, %c0_45, %c224] : memref<2x4x256xf32, #tpu.memory_space<vmem>>, vector<1x4x16xf32>
    %45 = vector.shape_cast %44 : vector<1x4x16xf32> to vector<4x16xf32>
    %c0_46 = arith.constant 0 : index
    %c271 = arith.constant 271 : index
    %46 = vector.load %arg5[%c0_46, %c271] : memref<8x896xf32, #tpu.memory_space<vmem>>, vector<4x16xf32>
    tpu.vector_store %arg5[%c0_46, %c271], %45 {strides = array<i32>} : memref<8x896xf32, #tpu.memory_space<vmem>>, vector<4x16xf32>,
    %c0_47 = arith.constant 0 : index
    %c0_48 = arith.constant 0 : index
    %c240 = arith.constant 240 : index
    %47 = vector.load %arg1[%c0_47, %c0_48, %c240] : memref<2x4x256xf32, #tpu.memory_space<vmem>>, vector<1x4x16xf32>
    %48 = vector.shape_cast %47 : vector<1x4x16xf32> to vector<4x16xf32>
    %c0_49 = arith.constant 0 : index
    %c289 = arith.constant 289 : index
    %49 = vector.load %arg5[%c0_49, %c289] : memref<8x896xf32, #tpu.memory_space<vmem>>, vector<4x16xf32>
    tpu.vector_store %arg5[%c0_49, %c289], %48 {strides = array<i32>} : memref<8x896xf32, #tpu.memory_space<vmem>>, vector<4x16xf32>,
    %c1 = arith.constant 1 : index
    %c0_50 = arith.constant 0 : index
    %c0_51 = arith.constant 0 : index
    %50 = vector.load %arg1[%c1, %c0_50, %c0_51] : memref<2x4x256xf32, #tpu.memory_space<vmem>>, vector<1x4x16xf32>
    %51 = vector.shape_cast %50 : vector<1x4x16xf32> to vector<4x16xf32>
    %c0_52 = arith.constant 0 : index
    %c403 = arith.constant 403 : index
    %52 = vector.load %arg5[%c0_52, %c403] : memref<8x896xf32, #tpu.memory_space<vmem>>, vector<4x16xf32>
    tpu.vector_store %arg5[%c0_52, %c403], %51 {strides = array<i32>} : memref<8x896xf32, #tpu.memory_space<vmem>>, vector<4x16xf32>,
    %c1_53 = arith.constant 1 : index
    %c0_54 = arith.constant 0 : index
    %c16_55 = arith.constant 16 : index
    %53 = vector.load %arg1[%c1_53, %c0_54, %c16_55] : memref<2x4x256xf32, #tpu.memory_space<vmem>>, vector<1x4x16xf32>
    %54 = vector.shape_cast %53 : vector<1x4x16xf32> to vector<4x16xf32>
    %c0_56 = arith.constant 0 : index
    %c421 = arith.constant 421 : index
    %55 = vector.load %arg5[%c0_56, %c421] : memref<8x896xf32, #tpu.memory_space<vmem>>, vector<4x16xf32>
    tpu.vector_store %arg5[%c0_56, %c421], %54 {strides = array<i32>} : memref<8x896xf32, #tpu.memory_space<vmem>>, vector<4x16xf32>,
    %c1_57 = arith.constant 1 : index
    %c0_58 = arith.constant 0 : index
    %c32_59 = arith.constant 32 : index
    %56 = vector.load %arg1[%c1_57, %c0_58, %c32_59] : memref<2x4x256xf32, #tpu.memory_space<vmem>>, vector<1x4x16xf32>
    %57 = vector.shape_cast %56 : vector<1x4x16xf32> to vector<4x16xf32>
    %c0_60 = arith.constant 0 : index
    %c439 = arith.constant 439 : index
    %58 = vector.load %arg5[%c0_60, %c439] : memref<8x896xf32, #tpu.memory_space<vmem>>, vector<4x16xf32>
    tpu.vector_store %arg5[%c0_60, %c439], %57 {strides = array<i32>} : memref<8x896xf32, #tpu.memory_space<vmem>>, vector<4x16xf32>,
    %c1_61 = arith.constant 1 : index
    %c0_62 = arith.constant 0 : index
    %c48_63 = arith.constant 48 : index
    %59 = vector.load %arg1[%c1_61, %c0_62, %c48_63] : memref<2x4x256xf32, #tpu.memory_space<vmem>>, vector<1x4x16xf32>
    %60 = vector.shape_cast %59 : vector<1x4x16xf32> to vector<4x16xf32>
    %c0_64 = arith.constant 0 : index
    %c457 = arith.constant 457 : index
    %61 = vector.load %arg5[%c0_64, %c457] : memref<8x896xf32, #tpu.memory_space<vmem>>, vector<4x16xf32>
    tpu.vector_store %arg5[%c0_64, %c457], %60 {strides = array<i32>} : memref<8x896xf32, #tpu.memory_space<vmem>>, vector<4x16xf32>,
    %c1_65 = arith.constant 1 : index
    %c0_66 = arith.constant 0 : index
    %c64_67 = arith.constant 64 : index
    %62 = vector.load %arg1[%c1_65, %c0_66, %c64_67] : memref<2x4x256xf32, #tpu.memory_space<vmem>>, vector<1x4x16xf32>
    %63 = vector.shape_cast %62 : vector<1x4x16xf32> to vector<4x16xf32>
    %c0_68 = arith.constant 0 : index
    %c475 = arith.constant 475 : index
    %64 = vector.load %arg5[%c0_68, %c475] : memref<8x896xf32, #tpu.memory_space<vmem>>, vector<4x16xf32>
    tpu.vector_store %arg5[%c0_68, %c475], %63 {strides = array<i32>} : memref<8x896xf32, #tpu.memory_space<vmem>>, vector<4x16xf32>,
    %c1_69 = arith.constant 1 : index
    %c0_70 = arith.constant 0 : index
    %c80_71 = arith.constant 80 : index
    %65 = vector.load %arg1[%c1_69, %c0_70, %c80_71] : memref<2x4x256xf32, #tpu.memory_space<vmem>>, vector<1x4x16xf32>
    %66 = vector.shape_cast %65 : vector<1x4x16xf32> to vector<4x16xf32>
    %c0_72 = arith.constant 0 : index
    %c493 = arith.constant 493 : index
    %67 = vector.load %arg5[%c0_72, %c493] : memref<8x896xf32, #tpu.memory_space<vmem>>, vector<4x16xf32>
    tpu.vector_store %arg5[%c0_72, %c493], %66 {strides = array<i32>} : memref<8x896xf32, #tpu.memory_space<vmem>>, vector<4x16xf32>,
    %c1_73 = arith.constant 1 : index
    %c0_74 = arith.constant 0 : index
    %c96_75 = arith.constant 96 : index
    %68 = vector.load %arg1[%c1_73, %c0_74, %c96_75] : memref<2x4x256xf32, #tpu.memory_space<vmem>>, vector<1x4x16xf32>
    %69 = vector.shape_cast %68 : vector<1x4x16xf32> to vector<4x16xf32>
    %c0_76 = arith.constant 0 : index
    %c511 = arith.constant 511 : index
    %70 = vector.load %arg5[%c0_76, %c511] : memref<8x896xf32, #tpu.memory_space<vmem>>, vector<4x16xf32>
    tpu.vector_store %arg5[%c0_76, %c511], %69 {strides = array<i32>} : memref<8x896xf32, #tpu.memory_space<vmem>>, vector<4x16xf32>,
    %c1_77 = arith.constant 1 : index
    %c0_78 = arith.constant 0 : index
    %c112_79 = arith.constant 112 : index
    %71 = vector.load %arg1[%c1_77, %c0_78, %c112_79] : memref<2x4x256xf32, #tpu.memory_space<vmem>>, vector<1x4x16xf32>
    %72 = vector.shape_cast %71 : vector<1x4x16xf32> to vector<4x16xf32>
    %c0_80 = arith.constant 0 : index
    %c529 = arith.constant 529 : index
    %73 = vector.load %arg5[%c0_80, %c529] : memref<8x896xf32, #tpu.memory_space<vmem>>, vector<4x16xf32>
    tpu.vector_store %arg5[%c0_80, %c529], %72 {strides = array<i32>} : memref<8x896xf32, #tpu.memory_space<vmem>>, vector<4x16xf32>,
    %c1_81 = arith.constant 1 : index
    %c0_82 = arith.constant 0 : index
    %c128_83 = arith.constant 128 : index
    %74 = vector.load %arg1[%c1_81, %c0_82, %c128_83] : memref<2x4x256xf32, #tpu.memory_space<vmem>>, vector<1x4x16xf32>
    %75 = vector.shape_cast %74 : vector<1x4x16xf32> to vector<4x16xf32>
    %c0_84 = arith.constant 0 : index
    %c547 = arith.constant 547 : index
    %76 = vector.load %arg5[%c0_84, %c547] : memref<8x896xf32, #tpu.memory_space<vmem>>, vector<4x16xf32>
    tpu.vector_store %arg5[%c0_84, %c547], %75 {strides = array<i32>} : memref<8x896xf32, #tpu.memory_space<vmem>>, vector<4x16xf32>,
    %c1_85 = arith.constant 1 : index
    %c0_86 = arith.constant 0 : index
    %c144_87 = arith.constant 144 : index
    %77 = vector.load %arg1[%c1_85, %c0_86, %c144_87] : memref<2x4x256xf32, #tpu.memory_space<vmem>>, vector<1x4x16xf32>
    %78 = vector.shape_cast %77 : vector<1x4x16xf32> to vector<4x16xf32>
    %c0_88 = arith.constant 0 : index
    %c565 = arith.constant 565 : index
    %79 = vector.load %arg5[%c0_88, %c565] : memref<8x896xf32, #tpu.memory_space<vmem>>, vector<4x16xf32>
    tpu.vector_store %arg5[%c0_88, %c565], %78 {strides = array<i32>} : memref<8x896xf32, #tpu.memory_space<vmem>>, vector<4x16xf32>,
    %c1_89 = arith.constant 1 : index
    %c0_90 = arith.constant 0 : index
    %c160_91 = arith.constant 160 : index
    %80 = vector.load %arg1[%c1_89, %c0_90, %c160_91] : memref<2x4x256xf32, #tpu.memory_space<vmem>>, vector<1x4x16xf32>
    %81 = vector.shape_cast %80 : vector<1x4x16xf32> to vector<4x16xf32>
    %c0_92 = arith.constant 0 : index
    %c583 = arith.constant 583 : index
    %82 = vector.load %arg5[%c0_92, %c583] : memref<8x896xf32, #tpu.memory_space<vmem>>, vector<4x16xf32>
    tpu.vector_store %arg5[%c0_92, %c583], %81 {strides = array<i32>} : memref<8x896xf32, #tpu.memory_space<vmem>>, vector<4x16xf32>,
    %c1_93 = arith.constant 1 : index
    %c0_94 = arith.constant 0 : index
    %c176_95 = arith.constant 176 : index
    %83 = vector.load %arg1[%c1_93, %c0_94, %c176_95] : memref<2x4x256xf32, #tpu.memory_space<vmem>>, vector<1x4x16xf32>
    %84 = vector.shape_cast %83 : vector<1x4x16xf32> to vector<4x16xf32>
    %c0_96 = arith.constant 0 : index
    %c601 = arith.constant 601 : index
    %85 = vector.load %arg5[%c0_96, %c601] : memref<8x896xf32, #tpu.memory_space<vmem>>, vector<4x16xf32>
    tpu.vector_store %arg5[%c0_96, %c601], %84 {strides = array<i32>} : memref<8x896xf32, #tpu.memory_space<vmem>>, vector<4x16xf32>,
    %c1_97 = arith.constant 1 : index
    %c0_98 = arith.constant 0 : index
    %c192_99 = arith.constant 192 : index
    %86 = vector.load %arg1[%c1_97, %c0_98, %c192_99] : memref<2x4x256xf32, #tpu.memory_space<vmem>>, vector<1x4x16xf32>
    %87 = vector.shape_cast %86 : vector<1x4x16xf32> to vector<4x16xf32>
    %c0_100 = arith.constant 0 : index
    %c619 = arith.constant 619 : index
    %88 = vector.load %arg5[%c0_100, %c619] : memref<8x896xf32, #tpu.memory_space<vmem>>, vector<4x16xf32>
    tpu.vector_store %arg5[%c0_100, %c619], %87 {strides = array<i32>} : memref<8x896xf32, #tpu.memory_space<vmem>>, vector<4x16xf32>,
    %c1_101 = arith.constant 1 : index
    %c0_102 = arith.constant 0 : index
    %c208_103 = arith.constant 208 : index
    %89 = vector.load %arg1[%c1_101, %c0_102, %c208_103] : memref<2x4x256xf32, #tpu.memory_space<vmem>>, vector<1x4x16xf32>
    %90 = vector.shape_cast %89 : vector<1x4x16xf32> to vector<4x16xf32>
    %c0_104 = arith.constant 0 : index
    %c637 = arith.constant 637 : index
    %91 = vector.load %arg5[%c0_104, %c637] : memref<8x896xf32, #tpu.memory_space<vmem>>, vector<4x16xf32>
    tpu.vector_store %arg5[%c0_104, %c637], %90 {strides = array<i32>} : memref<8x896xf32, #tpu.memory_space<vmem>>, vector<4x16xf32>,
    %c1_105 = arith.constant 1 : index
    %c0_106 = arith.constant 0 : index
    %c224_107 = arith.constant 224 : index
    %92 = vector.load %arg1[%c1_105, %c0_106, %c224_107] : memref<2x4x256xf32, #tpu.memory_space<vmem>>, vector<1x4x16xf32>
    %93 = vector.shape_cast %92 : vector<1x4x16xf32> to vector<4x16xf32>
    %c0_108 = arith.constant 0 : index
    %c655 = arith.constant 655 : index
    %94 = vector.load %arg5[%c0_108, %c655] : memref<8x896xf32, #tpu.memory_space<vmem>>, vector<4x16xf32>
    tpu.vector_store %arg5[%c0_108, %c655], %93 {strides = array<i32>} : memref<8x896xf32, #tpu.memory_space<vmem>>, vector<4x16xf32>,
    %c1_109 = arith.constant 1 : index
    %c0_110 = arith.constant 0 : index
    %c240_111 = arith.constant 240 : index
    %95 = vector.load %arg1[%c1_109, %c0_110, %c240_111] : memref<2x4x256xf32, #tpu.memory_space<vmem>>, vector<1x4x16xf32>
    %96 = vector.shape_cast %95 : vector<1x4x16xf32> to vector<4x16xf32>
    %c0_112 = arith.constant 0 : index
    %c673 = arith.constant 673 : index
    %97 = vector.load %arg5[%c0_112, %c673] : memref<8x896xf32, #tpu.memory_space<vmem>>, vector<4x16xf32>
    tpu.vector_store %arg5[%c0_112, %c673], %96 {strides = array<i32>} : memref<8x896xf32, #tpu.memory_space<vmem>>, vector<4x16xf32>,
    %cst_113 = arith.constant 0.000000e+00 : f32
    %98 = vector.broadcast %cst_113 : f32 to vector<8x768xf32>
    %c0_114 = arith.constant 0 : index
    %c0_115 = arith.constant 0 : index
    %99 = vector.load %arg5[%c0_114, %c0_115] : memref<8x896xf32, #tpu.memory_space<vmem>>, vector<8x768xf32>
    %c0_116 = arith.constant 0 : index
    %c0_117 = arith.constant 0 : index
    %c0_118 = arith.constant 0 : index
    %100 = vector.load %arg2[%c0_116, %c0_117, %c0_118] : memref<9x8x8xf32, #tpu.memory_space<vmem>>, vector<1x8x8xf32>
    %101 = vector.shape_cast %100 : vector<1x8x8xf32> to vector<8x8xf32>
    %cst_119 = arith.constant dense<0.000000e+00> : vector<8x768xf32>
    %102 = tpu.matmul %101, %99, %cst_119 {dimension_numbers = #tpu.dot_dimension_numbers<[1], [0], [0], [1], [0, 0, 1, 1], [], []>} : vector<8x8xf32>, vector<8x768xf32>, vector<8x768xf32> -> vector<8x768xf32>
    %103 = arith.addf %98, %102 : vector<8x768xf32>
    %c0_120 = arith.constant 0 : index
    %c1_121 = arith.constant 1 : index
    %104 = vector.load %arg5[%c0_120, %c1_121] : memref<8x896xf32, #tpu.memory_space<vmem>>, vector<8x768xf32>
    %c1_122 = arith.constant 1 : index
    %c0_123 = arith.constant 0 : index
    %c0_124 = arith.constant 0 : index
    %105 = vector.load %arg2[%c1_122, %c0_123, %c0_124] : memref<9x8x8xf32, #tpu.memory_space<vmem>>, vector<1x8x8xf32>
    %106 = vector.shape_cast %105 : vector<1x8x8xf32> to vector<8x8xf32>
    %cst_125 = arith.constant dense<0.000000e+00> : vector<8x768xf32>
    %107 = tpu.matmul %106, %104, %cst_125 {dimension_numbers = #tpu.dot_dimension_numbers<[1], [0], [0], [1], [0, 0, 1, 1], [], []>} : vector<8x8xf32>, vector<8x768xf32>, vector<8x768xf32> -> vector<8x768xf32>
    %108 = arith.addf %103, %107 : vector<8x768xf32>
    %c0_126 = arith.constant 0 : index
    %c2 = arith.constant 2 : index
    %109 = vector.load %arg5[%c0_126, %c2] : memref<8x896xf32, #tpu.memory_space<vmem>>, vector<8x768xf32>
    %c2_127 = arith.constant 2 : index
    %c0_128 = arith.constant 0 : index
    %c0_129 = arith.constant 0 : index
    %110 = vector.load %arg2[%c2_127, %c0_128, %c0_129] : memref<9x8x8xf32, #tpu.memory_space<vmem>>, vector<1x8x8xf32>
    %111 = vector.shape_cast %110 : vector<1x8x8xf32> to vector<8x8xf32>
    %cst_130 = arith.constant dense<0.000000e+00> : vector<8x768xf32>
    %112 = tpu.matmul %111, %109, %cst_130 {dimension_numbers = #tpu.dot_dimension_numbers<[1], [0], [0], [1], [0, 0, 1, 1], [], []>} : vector<8x8xf32>, vector<8x768xf32>, vector<8x768xf32> -> vector<8x768xf32>
    %113 = arith.addf %108, %112 : vector<8x768xf32>
    %c0_131 = arith.constant 0 : index
    %c18 = arith.constant 18 : index
    %114 = vector.load %arg5[%c0_131, %c18] : memref<8x896xf32, #tpu.memory_space<vmem>>, vector<8x768xf32>
    %c3 = arith.constant 3 : index
    %c0_132 = arith.constant 0 : index
    %c0_133 = arith.constant 0 : index
    %115 = vector.load %arg2[%c3, %c0_132, %c0_133] : memref<9x8x8xf32, #tpu.memory_space<vmem>>, vector<1x8x8xf32>
    %116 = vector.shape_cast %115 : vector<1x8x8xf32> to vector<8x8xf32>
    %cst_134 = arith.constant dense<0.000000e+00> : vector<8x768xf32>
    %117 = tpu.matmul %116, %114, %cst_134 {dimension_numbers = #tpu.dot_dimension_numbers<[1], [0], [0], [1], [0, 0, 1, 1], [], []>} : vector<8x8xf32>, vector<8x768xf32>, vector<8x768xf32> -> vector<8x768xf32>
    %118 = arith.addf %113, %117 : vector<8x768xf32>
    %c0_135 = arith.constant 0 : index
    %c19_136 = arith.constant 19 : index
    %119 = vector.load %arg5[%c0_135, %c19_136] : memref<8x896xf32, #tpu.memory_space<vmem>>, vector<8x768xf32>
    %c4 = arith.constant 4 : index
    %c0_137 = arith.constant 0 : index
    %c0_138 = arith.constant 0 : index
    %120 = vector.load %arg2[%c4, %c0_137, %c0_138] : memref<9x8x8xf32, #tpu.memory_space<vmem>>, vector<1x8x8xf32>
    %121 = vector.shape_cast %120 : vector<1x8x8xf32> to vector<8x8xf32>
    %cst_139 = arith.constant dense<0.000000e+00> : vector<8x768xf32>
    %122 = tpu.matmul %121, %119, %cst_139 {dimension_numbers = #tpu.dot_dimension_numbers<[1], [0], [0], [1], [0, 0, 1, 1], [], []>} : vector<8x8xf32>, vector<8x768xf32>, vector<8x768xf32> -> vector<8x768xf32>
    %123 = arith.addf %118, %122 : vector<8x768xf32>
    %c0_140 = arith.constant 0 : index
    %c20 = arith.constant 20 : index
    %124 = vector.load %arg5[%c0_140, %c20] : memref<8x896xf32, #tpu.memory_space<vmem>>, vector<8x768xf32>
    %c5 = arith.constant 5 : index
    %c0_141 = arith.constant 0 : index
    %c0_142 = arith.constant 0 : index
    %125 = vector.load %arg2[%c5, %c0_141, %c0_142] : memref<9x8x8xf32, #tpu.memory_space<vmem>>, vector<1x8x8xf32>
    %126 = vector.shape_cast %125 : vector<1x8x8xf32> to vector<8x8xf32>
    %cst_143 = arith.constant dense<0.000000e+00> : vector<8x768xf32>
    %127 = tpu.matmul %126, %124, %cst_143 {dimension_numbers = #tpu.dot_dimension_numbers<[1], [0], [0], [1], [0, 0, 1, 1], [], []>} : vector<8x8xf32>, vector<8x768xf32>, vector<8x768xf32> -> vector<8x768xf32>
    %128 = arith.addf %123, %127 : vector<8x768xf32>
    %c0_144 = arith.constant 0 : index
    %c36 = arith.constant 36 : index
    %129 = vector.load %arg5[%c0_144, %c36] : memref<8x896xf32, #tpu.memory_space<vmem>>, vector<8x768xf32>
    %c6 = arith.constant 6 : index
    %c0_145 = arith.constant 0 : index
    %c0_146 = arith.constant 0 : index
    %130 = vector.load %arg2[%c6, %c0_145, %c0_146] : memref<9x8x8xf32, #tpu.memory_space<vmem>>, vector<1x8x8xf32>
    %131 = vector.shape_cast %130 : vector<1x8x8xf32> to vector<8x8xf32>
    %cst_147 = arith.constant dense<0.000000e+00> : vector<8x768xf32>
    %132 = tpu.matmul %131, %129, %cst_147 {dimension_numbers = #tpu.dot_dimension_numbers<[1], [0], [0], [1], [0, 0, 1, 1], [], []>} : vector<8x8xf32>, vector<8x768xf32>, vector<8x768xf32> -> vector<8x768xf32>
    %133 = arith.addf %128, %132 : vector<8x768xf32>
    %c0_148 = arith.constant 0 : index
    %c37_149 = arith.constant 37 : index
    %134 = vector.load %arg5[%c0_148, %c37_149] : memref<8x896xf32, #tpu.memory_space<vmem>>, vector<8x768xf32>
    %c7 = arith.constant 7 : index
    %c0_150 = arith.constant 0 : index
    %c0_151 = arith.constant 0 : index
    %135 = vector.load %arg2[%c7, %c0_150, %c0_151] : memref<9x8x8xf32, #tpu.memory_space<vmem>>, vector<1x8x8xf32>
    %136 = vector.shape_cast %135 : vector<1x8x8xf32> to vector<8x8xf32>
    %cst_152 = arith.constant dense<0.000000e+00> : vector<8x768xf32>
    %137 = tpu.matmul %136, %134, %cst_152 {dimension_numbers = #tpu.dot_dimension_numbers<[1], [0], [0], [1], [0, 0, 1, 1], [], []>} : vector<8x8xf32>, vector<8x768xf32>, vector<8x768xf32> -> vector<8x768xf32>
    %138 = arith.addf %133, %137 : vector<8x768xf32>
    %c0_153 = arith.constant 0 : index
    %c38 = arith.constant 38 : index
    %139 = vector.load %arg5[%c0_153, %c38] : memref<8x896xf32, #tpu.memory_space<vmem>>, vector<8x768xf32>
    %c8 = arith.constant 8 : index
    %c0_154 = arith.constant 0 : index
    %c0_155 = arith.constant 0 : index
    %140 = vector.load %arg2[%c8, %c0_154, %c0_155] : memref<9x8x8xf32, #tpu.memory_space<vmem>>, vector<1x8x8xf32>
    %141 = vector.shape_cast %140 : vector<1x8x8xf32> to vector<8x8xf32>
    %cst_156 = arith.constant dense<0.000000e+00> : vector<8x768xf32>
    %142 = tpu.matmul %141, %139, %cst_156 {dimension_numbers = #tpu.dot_dimension_numbers<[1], [0], [0], [1], [0, 0, 1, 1], [], []>} : vector<8x8xf32>, vector<8x768xf32>, vector<8x768xf32> -> vector<8x768xf32>
    %143 = arith.addf %138, %142 : vector<8x768xf32>
    %c0_157 = arith.constant 0 : index
    %c0_158 = arith.constant 0 : index
    %144 = vector.load %arg3[%c0_157, %c0_158] : memref<8x1xf32, #tpu.memory_space<vmem>>, vector<8x1xf32>
    %145 = vector.broadcast %144 : vector<8x1xf32> to vector<8x768xf32>
    %146 = arith.addf %143, %145 : vector<8x768xf32>
    %147 = vector.extract_strided_slice %146 {offsets = [0, 0], sizes = [8, 384], strides = [1, 1]} : vector<8x768xf32> to vector<8x384xf32>
    %c0_159 = arith.constant 0 : index
    %c0_160 = arith.constant 0 : index
    %c0_161 = arith.constant 0 : index
    %148 = vector.load %arg4[%c0_159, %c0_160, %c0_161] : memref<2x8x384xf32, #tpu.memory_space<vmem>>, vector<1x8x384xf32>
    %149 = vector.shape_cast %148 : vector<1x8x384xf32> to vector<8x384xf32>
    %150 = vector.shape_cast %147 : vector<8x384xf32> to vector<1x8x384xf32>
    tpu.vector_store %arg4[%c0_159, %c0_160, %c0_161], %150 {strides = array<i32>} : memref<2x8x384xf32, #tpu.memory_space<vmem>>, vector<1x8x384xf32>,
    %151 = vector.extract_strided_slice %146 {offsets = [0, 384], sizes = [8, 384], strides = [1, 1]} : vector<8x768xf32> to vector<8x384xf32>
    %c1_162 = arith.constant 1 : index
    %c0_163 = arith.constant 0 : index
    %c0_164 = arith.constant 0 : index
    %152 = vector.load %arg4[%c1_162, %c0_163, %c0_164] : memref<2x8x384xf32, #tpu.memory_space<vmem>>, vector<1x8x384xf32>
    %153 = vector.shape_cast %152 : vector<1x8x384xf32> to vector<8x384xf32>
    %154 = vector.shape_cast %151 : vector<8x384xf32> to vector<1x8x384xf32>
    tpu.vector_store %arg4[%c1_162, %c0_163, %c0_164], %154 {strides = array<i32>} : memref<2x8x384xf32, #tpu.memory_space<vmem>>, vector<1x8x384xf32>,
    return
  }
  func.func @transform_0(%arg0: i32) -> (i32, i32, i32) {
    %c0_i32 = arith.constant 0 : i32
    %c0_i32_0 = arith.constant 0 : i32
    %c0_i32_1 = arith.constant 0 : i32
    return %arg0, %c0_i32, %c0_i32_0 : i32, i32, i32
  }
  func.func @transform_1(%arg0: i32) -> (i32, i32, i32) {
    %c0_i32 = arith.constant 0 : i32
    %c0_i32_0 = arith.constant 0 : i32
    %c0_i32_1 = arith.constant 0 : i32
    %c0_i32_2 = arith.constant 0 : i32
    return %c0_i32, %c0_i32_0, %c0_i32_1 : i32, i32, i32
  }
  func.func @transform_2(%arg0: i32) -> (i32, i32) {
    %c0_i32 = arith.constant 0 : i32
    %c0_i32_0 = arith.constant 0 : i32
    %c0_i32_1 = arith.constant 0 : i32
    return %c0_i32, %c0_i32_0 : i32, i32
  }
  func.func @transform_3(%arg0: i32) -> (i32, i32, i32) {
    %c0_i32 = arith.constant 0 : i32
    %c0_i32_0 = arith.constant 0 : i32
    %c0_i32_1 = arith.constant 0 : i32
    return %arg0, %c0_i32, %c0_i32_0 : i32, i32, i32
  }
}

</mosaic_0001>

<llo_original>
// kernel: tpu_custom_call.1
$region0: #{tpu_custom_call.1}
  #allocation0 [shape = 'u32[]', space=smem, size = 0x4, offset = 0x4, fixed_abs, tag = 'smem constant byte address 0x4 - core index']
  #allocation1 [shape = 'u32[144,128]{1,0:T(1,128)}', space=vmem, size = 0x12000, scoped, tag = 'internal scratch']
  #allocation2 [shape = 'f32[8,896]{1,0:T(8,128)}', space=vmem, size = 0x7000, scoped, tag = 'scratch operand']
  %s0 = inlined_call_operand.vmem [shape: f32[2,4,256], index: 0, kind: input, shape index: {}]
  %s1 = inlined_call_operand.vmem [shape: f32[9,8,8], index: 1, kind: input, shape index: {}]
  %s2 = inlined_call_operand.vmem [shape: f32[8,1], index: 2, kind: input, shape index: {}]
  %s3 = inlined_call_operand.hbm [shape: f32[2,8,384], index: 3, kind: output, shape index: {}]
  %s4 = sld [smem:[#allocation0]]
  $region22: #{tpu_custom_call.1} parent=0
    _
  %s6 = ssub.s32 1, %s4
  %s7 = scalar_select 0, %s6, %s4
  $region1: #{tpu_custom_call.1} parent=0
    #allocation3 [shape = 'u8[24576]{0}', space=vmem, size = 0x6000, scoped, tag = 'output window, operand 0, single buffered']
    #allocation4 [shape = 's32[1]{0}', space=sflag, size = 0x4, scoped, tag = 'scoped memory for tpu_custom_call.1']
    %8 = vsyncpa [#allocation4], 0
    // Predicated region
    $region2: #{tpu_custom_call.1} parent=1 // pred_check
      _
    $region3: #{tpu_custom_call.1} parent=1 // pred_check_branch
      %10 = sbr.rel (0) target = $region5
    $region4: #{tpu_custom_call.1} parent=1 // pred_region
      _
    $region5: #{tpu_custom_call.1} parent=1 // pred_fallthru
      _
    // Predicated region
    $region6: #{tpu_custom_call.1} parent=1 // pred_check
      _
    $region7: #{tpu_custom_call.1} parent=1 // pred_check_branch
      %12 = sbr.rel (0) target = $region9
    $region8: #{tpu_custom_call.1} parent=1 // pred_region
      _
    $region9: #{tpu_custom_call.1} parent=1 // pred_fallthru
      _
    // Predicated region
    $region10: #{tpu_custom_call.1} parent=1 // pred_check
      _
    $region11: #{tpu_custom_call.1} parent=1 // pred_check_branch
      %14 = sbr.rel (0) target = $region13
    $region12: #{tpu_custom_call.1} parent=1 // pred_region
      _
    $region13: #{tpu_custom_call.1} parent=1 // pred_fallthru
      _
    %15 = vst [vmem:[#allocation2] sm:$0xff] 0.0
    %16 = vst [vmem:[#allocation2 + $0x8] sm:$0xff] 0.0
    %17 = vst [vmem:[#allocation2 + $0x10] sm:$0xff] 0.0
    %18 = vst [vmem:[#allocation2 + $0x18] sm:$0xff] 0.0
    %19 = vst [vmem:[#allocation2 + $0x20] sm:$0xff] 0.0
    %20 = vst [vmem:[#allocation2 + $0x28] sm:$0xff] 0.0
    %21 = vst [vmem:[#allocation2 + $0x30] sm:$0xff] 0.0
    %v22 = vld [vmem:[%s0] sm:$0xf]
    %24 = vrot.lane.b32.xlu0 %v22, 19
    %v25 = vpop.permute.xlu0 %24
    %vm27 = vcmask 281752
    %28 = vst.msk [vmem:[#allocation2] sm:$0xf] %vm27, %v25
    %v29 = vld [vmem:[%s0] sm:$0xf]
    %31 = vrot.lane.b32.xlu0 %v29, 21
    %v32 = vpop.permute.xlu0 %31
    %vm34 = vcmask 429352
    %35 = vst.msk [vmem:[#allocation2] sm:$0xf] %vm34, %v32
    %v36 = vld [vmem:[%s0] sm:$0xf]
    %38 = vrot.lane.b32.xlu0 %v36, 23
    %v39 = vpop.permute.xlu0 %38
    %vm41 = vcmask 576952
    %42 = vst.msk [vmem:[#allocation2] sm:$0xf] %vm41, %v39
    %v43 = vld [vmem:[%s0] sm:$0xf]
    %45 = vrot.lane.b32.xlu0 %v43, 25
    %v46 = vpop.permute.xlu0 %45
    %vm48 = vcmask 724552
    %49 = vst.msk [vmem:[#allocation2] sm:$0xf] %vm48, %v46
    %v50 = vld [vmem:[%s0] sm:$0xf]
    %52 = vrot.lane.b32.xlu0 %v50, 27
    %v53 = vpop.permute.xlu0 %52
    %vm55 = vcmask 872152
    %56 = vst.msk [vmem:[#allocation2] sm:$0xf] %vm55, %v53
    %v57 = vld [vmem:[%s0] sm:$0xf]
    %59 = vrot.lane.b32.xlu0 %v57, 29
    %v60 = vpop.permute.xlu0 %59
    %vm62 = vcmask 1019752
    %63 = vst.msk [vmem:[#allocation2] sm:$0xf] %vm62, %v60
    %v64 = vld [vmem:[%s0] sm:$0xf]
    %66 = vrot.lane.b32.xlu0 %v64, 31
    %v67 = vpop.permute.xlu0 %66
    %vm69 = vcmask 1044472
    %70 = vst.msk [vmem:[#allocation2] sm:$0xf] %vm69, %v67
    %vm71 = vcmask 117760
    %72 = vst.msk [vmem:[#allocation2 + $0x8] sm:$0xf] %vm71, %v67
    %v73 = vld [vmem:[%s0] sm:$0xf]
    %75 = vrot.lane.b32.xlu0 %v73, 33
    %v76 = vpop.permute.xlu0 %75
    %vm78 = vcmask 265352
    %79 = vst.msk [vmem:[#allocation2 + $0x8] sm:$0xf] %vm78, %v76
    %v80 = vld [vmem:[%s0 + $0x4] sm:$0xf]
    %82 = vrot.lane.b32.xlu0 %v80, 35
    %v83 = vpop.permute.xlu0 %82
    %vm85 = vcmask 412952
    %86 = vst.msk [vmem:[#allocation2 + $0x8] sm:$0xf] %vm85, %v83
    %v87 = vld [vmem:[%s0 + $0x4] sm:$0xf]
    %89 = vrot.lane.b32.xlu0 %v87, 37
    %v90 = vpop.permute.xlu0 %89
    %vm92 = vcmask 560552
    %93 = vst.msk [vmem:[#allocation2 + $0x8] sm:$0xf] %vm92, %v90
    %v94 = vld [vmem:[%s0 + $0x4] sm:$0xf]
    %96 = vrot.lane.b32.xlu0 %v94, 39
    %v97 = vpop.permute.xlu0 %96
    %vm99 = vcmask 708152
    %100 = vst.msk [vmem:[#allocation2 + $0x8] sm:$0xf] %vm99, %v97
    %v101 = vld [vmem:[%s0 + $0x4] sm:$0xf]
    %103 = vrot.lane.b32.xlu0 %v101, 41
    %v104 = vpop.permute.xlu0 %103
    %vm106 = vcmask 855752
    %107 = vst.msk [vmem:[#allocation2 + $0x8] sm:$0xf] %vm106, %v104
    %v108 = vld [vmem:[%s0 + $0x4] sm:$0xf]
    %110 = vrot.lane.b32.xlu0 %v108, 43
    %v111 = vpop.permute.xlu0 %110
    %vm113 = vcmask 1003352
    %114 = vst.msk [vmem:[#allocation2 + $0x8] sm:$0xf] %vm113, %v111
    %v115 = vld [vmem:[%s0 + $0x4] sm:$0xf]
    %117 = vrot.lane.b32.xlu0 %v115, 45
    %v118 = vpop.permute.xlu0 %117
    %vm120 = vcmask 1044456
    %121 = vst.msk [vmem:[#allocation2 + $0x8] sm:$0xf] %vm120, %v118
    %vm122 = vcmask 101376
    %123 = vst.msk [vmem:[#allocation2 + $0x10] sm:$0xf] %vm122, %v118
    %v124 = vld [vmem:[%s0 + $0x4] sm:$0xf]
    %126 = vrot.lane.b32.xlu0 %v124, 47
    %v127 = vpop.permute.xlu0 %126
    %vm129 = vcmask 248952
    %130 = vst.msk [vmem:[#allocation2 + $0x10] sm:$0xf] %vm129, %v127
    %v131 = vld [vmem:[%s0 + $0x4] sm:$0xf]
    %133 = vrot.lane.b32.xlu0 %v131, 49
    %v134 = vpop.permute.xlu0 %133
    %vm136 = vcmask 396552
    %137 = vst.msk [vmem:[#allocation2 + $0x10] sm:$0xf] %vm136, %v134
    %s138 = scalar_lea.vmem %s0, 8
    %v139 = vld [vmem:[%s138] sm:$0xf]
    %141 = vrot.lane.b32.xlu0 %v139, 19
    %v142 = vpop.permute.xlu0 %141
    %144 = vst.msk [vmem:[#allocation2 + $0x18] sm:$0xf] %vm27, %v142
    %v145 = vld [vmem:[%s138] sm:$0xf]
    %147 = vrot.lane.b32.xlu0 %v145, 21
    %v148 = vpop.permute.xlu0 %147
    %150 = vst.msk [vmem:[#allocation2 + $0x18] sm:$0xf] %vm34, %v148
    %v151 = vld [vmem:[%s138] sm:$0xf]
    %153 = vrot.lane.b32.xlu0 %v151, 23
    %v154 = vpop.permute.xlu0 %153
    %156 = vst.msk [vmem:[#allocation2 + $0x18] sm:$0xf] %vm41, %v154
    %v157 = vld [vmem:[%s138] sm:$0xf]
    %159 = vrot.lane.b32.xlu0 %v157, 25
    %v160 = vpop.permute.xlu0 %159
    %162 = vst.msk [vmem:[#allocation2 + $0x18] sm:$0xf] %vm48, %v160
    %v163 = vld [vmem:[%s138] sm:$0xf]
    %165 = vrot.lane.b32.xlu0 %v163, 27
    %v166 = vpop.permute.xlu0 %165
    %168 = vst.msk [vmem:[#allocation2 + $0x18] sm:$0xf] %vm55, %v166
    %v169 = vld [vmem:[%s138] sm:$0xf]
    %171 = vrot.lane.b32.xlu0 %v169, 29
    %v172 = vpop.permute.xlu0 %171
    %174 = vst.msk [vmem:[#allocation2 + $0x18] sm:$0xf] %vm62, %v172
    %v175 = vld [vmem:[%s138] sm:$0xf]
    %177 = vrot.lane.b32.xlu0 %v175, 31
    %v178 = vpop.permute.xlu0 %177
    %180 = vst.msk [vmem:[#allocation2 + $0x18] sm:$0xf] %vm69, %v178
    %181 = vst.msk [vmem:[#allocation2 + $0x20] sm:$0xf] %vm71, %v178
    %v182 = vld [vmem:[%s138] sm:$0xf]
    %184 = vrot.lane.b32.xlu0 %v182, 33
    %v185 = vpop.permute.xlu0 %184
    %187 = vst.msk [vmem:[#allocation2 + $0x20] sm:$0xf] %vm78, %v185
    %v188 = vld [vmem:[%s138 + $0x4] sm:$0xf]
    %190 = vrot.lane.b32.xlu0 %v188, 35
    %v191 = vpop.permute.xlu0 %190
    %193 = vst.msk [vmem:[#allocation2 + $0x20] sm:$0xf] %vm85, %v191
    %v194 = vld [vmem:[%s138 + $0x4] sm:$0xf]
    %196 = vrot.lane.b32.xlu0 %v194, 37
    %v197 = vpop.permute.xlu0 %196
    %199 = vst.msk [vmem:[#allocation2 + $0x20] sm:$0xf] %vm92, %v197
    %v200 = vld [vmem:[%s138 + $0x4] sm:$0xf]
    %202 = vrot.lane.b32.xlu0 %v200, 39
    %v203 = vpop.permute.xlu0 %202
    %205 = vst.msk [vmem:[#allocation2 + $0x20] sm:$0xf] %vm99, %v203
    %v206 = vld [vmem:[%s138 + $0x4] sm:$0xf]
    %208 = vrot.lane.b32.xlu0 %v206, 41
    %v209 = vpop.permute.xlu0 %208
    %211 = vst.msk [vmem:[#allocation2 + $0x20] sm:$0xf] %vm106, %v209
    %v212 = vld [vmem:[%s138 + $0x4] sm:$0xf]
    %214 = vrot.lane.b32.xlu0 %v212, 43
    %v215 = vpop.permute.xlu0 %214
    %217 = vst.msk [vmem:[#allocation2 + $0x20] sm:$0xf] %vm113, %v215
    %v218 = vld [vmem:[%s138 + $0x4] sm:$0xf]
    %220 = vrot.lane.b32.xlu0 %v218, 45
    %v221 = vpop.permute.xlu0 %220
    %223 = vst.msk [vmem:[#allocation2 + $0x20] sm:$0xf] %vm120, %v221
    %224 = vst.msk [vmem:[#allocation2 + $0x28] sm:$0xf] %vm122, %v221
    %v225 = vld [vmem:[%s138 + $0x4] sm:$0xf]
    %227 = vrot.lane.b32.xlu0 %v225, 47
    %v228 = vpop.permute.xlu0 %227
    %230 = vst.msk [vmem:[#allocation2 + $0x28] sm:$0xf] %vm129, %v228
    %v231 = vld [vmem:[%s138 + $0x4] sm:$0xf]
    %233 = vrot.lane.b32.xlu0 %v231, 49
    %v234 = vpop.permute.xlu0 %233
    %236 = vst.msk [vmem:[#allocation2 + $0x28] sm:$0xf] %vm136, %v234
    %v237 = vld [vmem:[#allocation2] sm:$0xff]
    %v238 = vld [vmem:[#allocation2 + $0x8] sm:$0xff]
    %v239 = vld [vmem:[#allocation2 + $0x10] sm:$0xff]
    %v240 = vld [vmem:[#allocation2 + $0x18] sm:$0xff]
    %v241 = vld [vmem:[#allocation2 + $0x20] sm:$0xff]
    %v242 = vld [vmem:[#allocation2 + $0x28] sm:$0xff]
    %v243 = vld [vmem:[%s1] sm:$0xff]
    %v244 = vld [vmem:[#allocation2] sm:$0xff]
    %v245 = vld [vmem:[#allocation2 + $0x8] sm:$0xff]
    %v246 = vld [vmem:[#allocation2 + $0x10] sm:$0xff]
    %v247 = vld [vmem:[#allocation2 + $0x18] sm:$0xff]
    %v248 = vld [vmem:[#allocation2 + $0x20] sm:$0xff]
    %v249 = vld [vmem:[#allocation2 + $0x28] sm:$0xff]
    %v250 = vld [vmem:[#allocation2 + $0x30] sm:$0xff]
    %s251 = scalar_lea.vmem %s1, 8
    %v252 = vld [vmem:[%s251] sm:$0xff]
    %260 = vrot.lane.b32.xlu0 %v244, 127
    %v261 = vpop.permute.xlu0 %260
    %262 = vrot.lane.b32.xlu0 %v245, 127
    %v263 = vpop.permute.xlu0 %262
    %264 = vrot.lane.b32.xlu0 %v246, 127
    %v265 = vpop.permute.xlu0 %264
    %266 = vrot.lane.b32.xlu0 %v247, 127
    %v267 = vpop.permute.xlu0 %266
    %268 = vrot.lane.b32.xlu0 %v248, 127
    %v269 = vpop.permute.xlu0 %268
    %270 = vrot.lane.b32.xlu0 %v249, 127
    %v271 = vpop.permute.xlu0 %270
    %272 = vrot.lane.b32.xlu0 %v250, 127
    %v273 = vpop.permute.xlu0 %272
    %vm274 = vcmask 1039360
    %v275 = vsel %vm274, %v261, %v263
    %v276 = vsel %vm274, %v263, %v265
    %v277 = vsel %vm274, %v265, %v267
    %v278 = vsel %vm274, %v267, %v269
    %v279 = vsel %vm274, %v269, %v271
    %v280 = vsel %vm274, %v271, %v273
    %vm287 = vcmask 64512
    %v289 = vsel %vm287, %v252, 0
    %291 = vmatprep.subr.mxu0 0.0
    %292 = vmatpush1.msra.mxu0 0.0
    %293 = vmatprep.subr.mxu0 0.0
    %294 = vmatpush1.msra.mxu0 0.0
    %295 = vmatprep.subr.mxu0 0.0
    %296 = vmatpush1.msra.mxu0 0.0
    %297 = vmatprep.subr.mxu0 0.0
    %298 = vmatpush1.msra.mxu0 0.0
    %299 = vmatprep.subr.mxu0 0.0
    %300 = vmatpush1.msra.mxu0 0.0
    %301 = vmatprep.subr.mxu0 0.0
    %302 = vmatpush1.msra.mxu0 0.0
    %303 = vmatprep.subr.mxu0 0.0
    %304 = vmatpush1.msra.mxu0 0.0
    %305 = vmatprep.subr.mxu0 0.0
    %306 = vmatpush1.msra.mxu0 0.0
    %307 = vmatprep.subr.mxu0 0.0
    %308 = vmatpush1.msra.mxu0 0.0
    %309 = vmatprep.subr.mxu0 0.0
    %310 = vmatpush1.msra.mxu0 0.0
    %311 = vmatprep.subr.mxu0 0.0
    %312 = vmatpush1.msra.mxu0 0.0
    %313 = vmatprep.subr.mxu0 0.0
    %314 = vmatpush1.msra.mxu0 0.0
    %315 = vmatprep.subr.mxu0 0.0
    %316 = vmatpush1.msra.mxu0 0.0
    %317 = vmatprep.subr.mxu0 0.0
    %318 = vmatpush1.msra.mxu0 0.0
    %319 = vmatprep.subr.mxu0 0.0
    %320 = vmatpush1.msra.mxu0 0.0
    %321 = vmatprep.subr.mxu0 %v276
    %322 = vmatpush1.msra.mxu0 %v275
    %323 = vmatprep.subr.mxu0 0.0
    %324 = vmatpush2.msra.mxu0 0.0
    %325 = vmatprep.subr.mxu0 0.0
    %326 = vmatpush2.msra.mxu0 0.0
    %327 = vmatprep.subr.mxu0 0.0
    %328 = vmatpush2.msra.mxu0 0.0
    %329 = vmatprep.subr.mxu0 0.0
    %330 = vmatpush2.msra.mxu0 0.0
    %331 = vmatprep.subr.mxu0 0.0
    %332 = vmatpush2.msra.mxu0 0.0
    %333 = vmatprep.subr.mxu0 0.0
    %334 = vmatpush2.msra.mxu0 0.0
    %335 = vmatprep.subr.mxu0 0.0
    %336 = vmatpush2.msra.mxu0 0.0
    %337 = vmatprep.subr.mxu0 0.0
    %338 = vmatpush2.msra.mxu0 0.0
    %339 = vmatprep.subr.mxu0 0.0
    %340 = vmatpush2.msra.mxu0 0.0
    %341 = vmatprep.subr.mxu0 0.0
    %342 = vmatpush2.msra.mxu0 0.0
    %343 = vmatprep.subr.mxu0 0.0
    %344 = vmatpush2.msra.mxu0 0.0
    %345 = vmatprep.subr.mxu0 0.0
    %346 = vmatpush2.msra.mxu0 0.0
    %347 = vmatprep.subr.mxu0 0.0
    %348 = vmatpush2.msra.mxu0 0.0
    %349 = vmatprep.subr.mxu0 0.0
    %350 = vmatpush2.msra.mxu0 0.0
    %351 = vmatprep.subr.mxu0 0.0
    %352 = vmatpush2.msra.mxu0 0.0
    %353 = vmatprep.subr.mxu0 0.0
    %354 = vmatpush2.msra.mxu0 0.0
    %355 = vmatprep.mubr.f32.mxu0 0.0
    %356 = vmatmul.mubr.f32.gmra.mxu0 %v289
    %v357 = vpop.f32.mrf.mxu0
    %v358 = vadd.f32 0.0, %v357
    %v359 = vpop.f32.mrf.mxu0
    %v360 = vadd.f32 0.0, %v359
    %361 = vdwg.mxu0
    %362 = vmatprep.subr.mxu0 0.0
    %363 = vmatpush1.msra.mxu0 0.0
    %364 = vmatprep.subr.mxu0 0.0
    %365 = vmatpush1.msra.mxu0 0.0
    %366 = vmatprep.subr.mxu0 0.0
    %367 = vmatpush1.msra.mxu0 0.0
    %368 = vmatprep.subr.mxu0 0.0
    %369 = vmatpush1.msra.mxu0 0.0
    %370 = vmatprep.subr.mxu0 0.0
    %371 = vmatpush1.msra.mxu0 0.0
    %372 = vmatprep.subr.mxu0 0.0
    %373 = vmatpush1.msra.mxu0 0.0
    %374 = vmatprep.subr.mxu0 0.0
    %375 = vmatpush1.msra.mxu0 0.0
    %376 = vmatprep.subr.mxu0 0.0
    %377 = vmatpush1.msra.mxu0 0.0
    %378 = vmatprep.subr.mxu0 0.0
    %379 = vmatpush1.msra.mxu0 0.0
    %380 = vmatprep.subr.mxu0 0.0
    %381 = vmatpush1.msra.mxu0 0.0
    %382 = vmatprep.subr.mxu0 0.0
    %383 = vmatpush1.msra.mxu0 0.0
    %384 = vmatprep.subr.mxu0 0.0
    %385 = vmatpush1.msra.mxu0 0.0
    %386 = vmatprep.subr.mxu0 0.0
    %387 = vmatpush1.msra.mxu0 0.0
    %388 = vmatprep.subr.mxu0 0.0
    %389 = vmatpush1.msra.mxu0 0.0
    %390 = vmatprep.subr.mxu0 0.0
    %391 = vmatpush1.msra.mxu0 0.0
    %392 = vmatprep.subr.mxu0 %v278
    %393 = vmatpush1.msra.mxu0 %v277
    %394 = vmatprep.subr.mxu0 0.0
    %395 = vmatpush2.msra.mxu0 0.0
    %396 = vmatprep.subr.mxu0 0.0
    %397 = vmatpush2.msra.mxu0 0.0
    %398 = vmatprep.subr.mxu0 0.0
    %399 = vmatpush2.msra.mxu0 0.0
    %400 = vmatprep.subr.mxu0 0.0
    %401 = vmatpush2.msra.mxu0 0.0
    %402 = vmatprep.subr.mxu0 0.0
    %403 = vmatpush2.msra.mxu0 0.0
    %404 = vmatprep.subr.mxu0 0.0
    %405 = vmatpush2.msra.mxu0 0.0
    %406 = vmatprep.subr.mxu0 0.0
    %407 = vmatpush2.msra.mxu0 0.0
    %408 = vmatprep.subr.mxu0 0.0
    %409 = vmatpush2.msra.mxu0 0.0
    %410 = vmatprep.subr.mxu0 0.0
    %411 = vmatpush2.msra.mxu0 0.0
    %412 = vmatprep.subr.mxu0 0.0
    %413 = vmatpush2.msra.mxu0 0.0
    %414 = vmatprep.subr.mxu0 0.0
    %415 = vmatpush2.msra.mxu0 0.0
    %416 = vmatprep.subr.mxu0 0.0
    %417 = vmatpush2.msra.mxu0 0.0
    %418 = vmatprep.subr.mxu0 0.0
    %419 = vmatpush2.msra.mxu0 0.0
    %420 = vmatprep.subr.mxu0 0.0
    %421 = vmatpush2.msra.mxu0 0.0
    %422 = vmatprep.subr.mxu0 0.0
    %423 = vmatpush2.msra.mxu0 0.0
    %424 = vmatprep.subr.mxu0 0.0
    %425 = vmatpush2.msra.mxu0 0.0
    %426 = vmatprep.mubr.f32.mxu0 0.0
    %427 = vmatmul.mubr.f32.gmra.mxu0 %v289
    %v428 = vpop.f32.mrf.mxu0
    %v429 = vadd.f32 0.0, %v428
    %v430 = vpop.f32.mrf.mxu0
    %v431 = vadd.f32 0.0, %v430
    %432 = vdwg.mxu0
    %433 = vmatprep.subr.mxu0 0.0
    %434 = vmatpush1.msra.mxu0 0.0
    %435 = vmatprep.subr.mxu0 0.0
    %436 = vmatpush1.msra.mxu0 0.0
    %437 = vmatprep.subr.mxu0 0.0
    %438 = vmatpush1.msra.mxu0 0.0
    %439 = vmatprep.subr.mxu0 0.0
    %440 = vmatpush1.msra.mxu0 0.0
    %441 = vmatprep.subr.mxu0 0.0
    %442 = vmatpush1.msra.mxu0 0.0
    %443 = vmatprep.subr.mxu0 0.0
    %444 = vmatpush1.msra.mxu0 0.0
    %445 = vmatprep.subr.mxu0 0.0
    %446 = vmatpush1.msra.mxu0 0.0
    %447 = vmatprep.subr.mxu0 0.0
    %448 = vmatpush1.msra.mxu0 0.0
    %449 = vmatprep.subr.mxu0 0.0
    %450 = vmatpush1.msra.mxu0 0.0
    %451 = vmatprep.subr.mxu0 0.0
    %452 = vmatpush1.msra.mxu0 0.0
    %453 = vmatprep.subr.mxu0 0.0
    %454 = vmatpush1.msra.mxu0 0.0
    %455 = vmatprep.subr.mxu0 0.0
    %456 = vmatpush1.msra.mxu0 0.0
    %457 = vmatprep.subr.mxu0 0.0
    %458 = vmatpush1.msra.mxu0 0.0
    %459 = vmatprep.subr.mxu0 0.0
    %460 = vmatpush1.msra.mxu0 0.0
    %461 = vmatprep.subr.mxu0 0.0
    %462 = vmatpush1.msra.mxu0 0.0
    %463 = vmatprep.subr.mxu0 %v280
    %464 = vmatpush1.msra.mxu0 %v279
    %465 = vmatprep.subr.mxu0 0.0
    %466 = vmatpush2.msra.mxu0 0.0
    %467 = vmatprep.subr.mxu0 0.0
    %468 = vmatpush2.msra.mxu0 0.0
    %469 = vmatprep.subr.mxu0 0.0
    %470 = vmatpush2.msra.mxu0 0.0
    %471 = vmatprep.subr.mxu0 0.0
    %472 = vmatpush2.msra.mxu0 0.0
    %473 = vmatprep.subr.mxu0 0.0
    %474 = vmatpush2.msra.mxu0 0.0
    %475 = vmatprep.subr.mxu0 0.0
    %476 = vmatpush2.msra.mxu0 0.0
    %477 = vmatprep.subr.mxu0 0.0
    %478 = vmatpush2.msra.mxu0 0.0
    %479 = vmatprep.subr.mxu0 0.0
    %480 = vmatpush2.msra.mxu0 0.0
    %481 = vmatprep.subr.mxu0 0.0
    %482 = vmatpush2.msra.mxu0 0.0
    %483 = vmatprep.subr.mxu0 0.0
    %484 = vmatpush2.msra.mxu0 0.0
    %485 = vmatprep.subr.mxu0 0.0
    %486 = vmatpush2.msra.mxu0 0.0
    %487 = vmatprep.subr.mxu0 0.0
    %488 = vmatpush2.msra.mxu0 0.0
    %489 = vmatprep.subr.mxu0 0.0
    %490 = vmatpush2.msra.mxu0 0.0
    %491 = vmatprep.subr.mxu0 0.0
    %492 = vmatpush2.msra.mxu0 0.0
    %493 = vmatprep.subr.mxu0 0.0
    %494 = vmatpush2.msra.mxu0 0.0
    %495 = vmatprep.subr.mxu0 0.0
    %496 = vmatpush2.msra.mxu0 0.0
    %497 = vmatprep.mubr.f32.mxu0 0.0
    %498 = vmatmul.mubr.f32.gmra.mxu0 %v289
    %v499 = vpop.f32.mrf.mxu0
    %v500 = vadd.f32 0.0, %v499
    %v501 = vpop.f32.mrf.mxu0
    %v502 = vadd.f32 0.0, %v501
    %503 = vdwg.mxu0
    %v505 = vsel %vm287, %v243, 0
    %507 = vmatprep.subr.mxu0 0.0
    %508 = vmatpush1.msra.mxu0 0.0
    %509 = vmatprep.subr.mxu0 0.0
    %510 = vmatpush1.msra.mxu0 0.0
    %511 = vmatprep.subr.mxu0 0.0
    %512 = vmatpush1.msra.mxu0 0.0
    %513 = vmatprep.subr.mxu0 0.0
    %514 = vmatpush1.msra.mxu0 0.0
    %515 = vmatprep.subr.mxu0 0.0
    %516 = vmatpush1.msra.mxu0 0.0
    %517 = vmatprep.subr.mxu0 0.0
    %518 = vmatpush1.msra.mxu0 0.0
    %519 = vmatprep.subr.mxu0 0.0
    %520 = vmatpush1.msra.mxu0 0.0
    %521 = vmatprep.subr.mxu0 0.0
    %522 = vmatpush1.msra.mxu0 0.0
    %523 = vmatprep.subr.mxu0 0.0
    %524 = vmatpush1.msra.mxu0 0.0
    %525 = vmatprep.subr.mxu0 0.0
    %526 = vmatpush1.msra.mxu0 0.0
    %527 = vmatprep.subr.mxu0 0.0
    %528 = vmatpush1.msra.mxu0 0.0
    %529 = vmatprep.subr.mxu0 0.0
    %530 = vmatpush1.msra.mxu0 0.0
    %531 = vmatprep.subr.mxu0 0.0
    %532 = vmatpush1.msra.mxu0 0.0
    %533 = vmatprep.subr.mxu0 0.0
    %534 = vmatpush1.msra.mxu0 0.0
    %535 = vmatprep.subr.mxu0 0.0
    %536 = vmatpush1.msra.mxu0 0.0
    %537 = vmatprep.subr.mxu0 %v238
    %538 = vmatpush1.msra.mxu0 %v237
    %539 = vmatprep.subr.mxu0 0.0
    %540 = vmatpush2.msra.mxu0 0.0
    %541 = vmatprep.subr.mxu0 0.0
    %542 = vmatpush2.msra.mxu0 0.0
    %543 = vmatprep.subr.mxu0 0.0
    %544 = vmatpush2.msra.mxu0 0.0
    %545 = vmatprep.subr.mxu0 0.0
    %546 = vmatpush2.msra.mxu0 0.0
    %547 = vmatprep.subr.mxu0 0.0
    %548 = vmatpush2.msra.mxu0 0.0
    %549 = vmatprep.subr.mxu0 0.0
    %550 = vmatpush2.msra.mxu0 0.0
    %551 = vmatprep.subr.mxu0 0.0
    %552 = vmatpush2.msra.mxu0 0.0
    %553 = vmatprep.subr.mxu0 0.0
    %554 = vmatpush2.msra.mxu0 0.0
    %555 = vmatprep.subr.mxu0 0.0
    %556 = vmatpush2.msra.mxu0 0.0
    %557 = vmatprep.subr.mxu0 0.0
    %558 = vmatpush2.msra.mxu0 0.0
    %559 = vmatprep.subr.mxu0 0.0
    %560 = vmatpush2.msra.mxu0 0.0
    %561 = vmatprep.subr.mxu0 0.0
    %562 = vmatpush2.msra.mxu0 0.0
    %563 = vmatprep.subr.mxu0 0.0
    %564 = vmatpush2.msra.mxu0 0.0
    %565 = vmatprep.subr.mxu0 0.0
    %566 = vmatpush2.msra.mxu0 0.0
    %567 = vmatprep.subr.mxu0 0.0
    %568 = vmatpush2.msra.mxu0 0.0
    %569 = vmatprep.subr.mxu0 0.0
    %570 = vmatpush2.msra.mxu0 0.0
    %571 = vmatprep.mubr.f32.mxu0 0.0
    %572 = vmatmul.mubr.f32.gmra.mxu0 %v505
    %v573 = vpop.f32.mrf.mxu0
    %v574 = vadd.f32 %v358, %v573
    %v575 = vpop.f32.mrf.mxu0
    %v576 = vadd.f32 %v360, %v575
    %577 = vdwg.mxu0
    %578 = vmatprep.subr.mxu0 0.0
    %579 = vmatpush1.msra.mxu0 0.0
    %580 = vmatprep.subr.mxu0 0.0
    %581 = vmatpush1.msra.mxu0 0.0
    %582 = vmatprep.subr.mxu0 0.0
    %583 = vmatpush1.msra.mxu0 0.0
    %584 = vmatprep.subr.mxu0 0.0
    %585 = vmatpush1.msra.mxu0 0.0
    %586 = vmatprep.subr.mxu0 0.0
    %587 = vmatpush1.msra.mxu0 0.0
    %588 = vmatprep.subr.mxu0 0.0
    %589 = vmatpush1.msra.mxu0 0.0
    %590 = vmatprep.subr.mxu0 0.0
    %591 = vmatpush1.msra.mxu0 0.0
    %592 = vmatprep.subr.mxu0 0.0
    %593 = vmatpush1.msra.mxu0 0.0
    %594 = vmatprep.subr.mxu0 0.0
    %595 = vmatpush1.msra.mxu0 0.0
    %596 = vmatprep.subr.mxu0 0.0
    %597 = vmatpush1.msra.mxu0 0.0
    %598 = vmatprep.subr.mxu0 0.0
    %599 = vmatpush1.msra.mxu0 0.0
    %600 = vmatprep.subr.mxu0 0.0
    %601 = vmatpush1.msra.mxu0 0.0
    %602 = vmatprep.subr.mxu0 0.0
    %603 = vmatpush1.msra.mxu0 0.0
    %604 = vmatprep.subr.mxu0 0.0
    %605 = vmatpush1.msra.mxu0 0.0
    %606 = vmatprep.subr.mxu0 0.0
    %607 = vmatpush1.msra.mxu0 0.0
    %608 = vmatprep.subr.mxu0 %v240
    %609 = vmatpush1.msra.mxu0 %v239
    %610 = vmatprep.subr.mxu0 0.0
    %611 = vmatpush2.msra.mxu0 0.0
    %612 = vmatprep.subr.mxu0 0.0
    %613 = vmatpush2.msra.mxu0 0.0
    %614 = vmatprep.subr.mxu0 0.0
    %615 = vmatpush2.msra.mxu0 0.0
    %616 = vmatprep.subr.mxu0 0.0
    %617 = vmatpush2.msra.mxu0 0.0
    %618 = vmatprep.subr.mxu0 0.0
    %619 = vmatpush2.msra.mxu0 0.0
    %620 = vmatprep.subr.mxu0 0.0
    %621 = vmatpush2.msra.mxu0 0.0
    %622 = vmatprep.subr.mxu0 0.0
    %623 = vmatpush2.msra.mxu0 0.0
    %624 = vmatprep.subr.mxu0 0.0
    %625 = vmatpush2.msra.mxu0 0.0
    %626 = vmatprep.subr.mxu0 0.0
    %627 = vmatpush2.msra.mxu0 0.0
    %628 = vmatprep.subr.mxu0 0.0
    %629 = vmatpush2.msra.mxu0 0.0
    %630 = vmatprep.subr.mxu0 0.0
    %631 = vmatpush2.msra.mxu0 0.0
    %632 = vmatprep.subr.mxu0 0.0
    %633 = vmatpush2.msra.mxu0 0.0
    %634 = vmatprep.subr.mxu0 0.0
    %635 = vmatpush2.msra.mxu0 0.0
    %636 = vmatprep.subr.mxu0 0.0
    %637 = vmatpush2.msra.mxu0 0.0
    %638 = vmatprep.subr.mxu0 0.0
    %639 = vmatpush2.msra.mxu0 0.0
    %640 = vmatprep.subr.mxu0 0.0
    %641 = vmatpush2.msra.mxu0 0.0
    %642 = vmatprep.mubr.f32.mxu0 0.0
    %643 = vmatmul.mubr.f32.gmra.mxu0 %v505
    %v644 = vpop.f32.mrf.mxu0
    %v645 = vadd.f32 %v429, %v644
    %v646 = vpop.f32.mrf.mxu0
    %v647 = vadd.f32 %v431, %v646
    %648 = vdwg.mxu0
    %649 = vmatprep.subr.mxu0 0.0
    %650 = vmatpush1.msra.mxu0 0.0
    %651 = vmatprep.subr.mxu0 0.0
    %652 = vmatpush1.msra.mxu0 0.0
    %653 = vmatprep.subr.mxu0 0.0
    %654 = vmatpush1.msra.mxu0 0.0
    %655 = vmatprep.subr.mxu0 0.0
    %656 = vmatpush1.msra.mxu0 0.0
    %657 = vmatprep.subr.mxu0 0.0
    %658 = vmatpush1.msra.mxu0 0.0
    %659 = vmatprep.subr.mxu0 0.0
    %660 = vmatpush1.msra.mxu0 0.0
    %661 = vmatprep.subr.mxu0 0.0
    %662 = vmatpush1.msra.mxu0 0.0
    %663 = vmatprep.subr.mxu0 0.0
    %664 = vmatpush1.msra.mxu0 0.0
    %665 = vmatprep.subr.mxu0 0.0
    %666 = vmatpush1.msra.mxu0 0.0
    %667 = vmatprep.subr.mxu0 0.0
    %668 = vmatpush1.msra.mxu0 0.0
    %669 = vmatprep.subr.mxu0 0.0
    %670 = vmatpush1.msra.mxu0 0.0
    %671 = vmatprep.subr.mxu0 0.0
    %672 = vmatpush1.msra.mxu0 0.0
    %673 = vmatprep.subr.mxu0 0.0
    %674 = vmatpush1.msra.mxu0 0.0
    %675 = vmatprep.subr.mxu0 0.0
    %676 = vmatpush1.msra.mxu0 0.0
    %677 = vmatprep.subr.mxu0 0.0
    %678 = vmatpush1.msra.mxu0 0.0
    %679 = vmatprep.subr.mxu0 %v242
    %680 = vmatpush1.msra.mxu0 %v241
    %681 = vmatprep.subr.mxu0 0.0
    %682 = vmatpush2.msra.mxu0 0.0
    %683 = vmatprep.subr.mxu0 0.0
    %684 = vmatpush2.msra.mxu0 0.0
    %685 = vmatprep.subr.mxu0 0.0
    %686 = vmatpush2.msra.mxu0 0.0
    %687 = vmatprep.subr.mxu0 0.0
    %688 = vmatpush2.msra.mxu0 0.0
    %689 = vmatprep.subr.mxu0 0.0
    %690 = vmatpush2.msra.mxu0 0.0
    %691 = vmatprep.subr.mxu0 0.0
    %692 = vmatpush2.msra.mxu0 0.0
    %693 = vmatprep.subr.mxu0 0.0
    %694 = vmatpush2.msra.mxu0 0.0
    %695 = vmatprep.subr.mxu0 0.0
    %696 = vmatpush2.msra.mxu0 0.0
    %697 = vmatprep.subr.mxu0 0.0
    %698 = vmatpush2.msra.mxu0 0.0
    %699 = vmatprep.subr.mxu0 0.0
    %700 = vmatpush2.msra.mxu0 0.0
    %701 = vmatprep.subr.mxu0 0.0
    %702 = vmatpush2.msra.mxu0 0.0
    %703 = vmatprep.subr.mxu0 0.0
    %704 = vmatpush2.msra.mxu0 0.0
    %705 = vmatprep.subr.mxu0 0.0
    %706 = vmatpush2.msra.mxu0 0.0
    %707 = vmatprep.subr.mxu0 0.0
    %708 = vmatpush2.msra.mxu0 0.0
    %709 = vmatprep.subr.mxu0 0.0
    %710 = vmatpush2.msra.mxu0 0.0
    %711 = vmatprep.subr.mxu0 0.0
    %712 = vmatpush2.msra.mxu0 0.0
    %713 = vmatprep.mubr.f32.mxu0 0.0
    %714 = vmatmul.mubr.f32.gmra.mxu0 %v505
    %v715 = vpop.f32.mrf.mxu0
    %v716 = vadd.f32 %v500, %v715
    %v717 = vpop.f32.mrf.mxu0
    %v718 = vadd.f32 %v502, %v717
    %719 = vdwg.mxu0
    %s720 = scalar_lea.vmem %s1, 16
    %v721 = vld [vmem:[%s720] sm:$0xff]
    %722 = vrot.lane.b32.xlu0 %v244, 126
    %v723 = vpop.permute.xlu0 %722
    %724 = vrot.lane.b32.xlu0 %v245, 126
    %v725 = vpop.permute.xlu0 %724
    %726 = vrot.lane.b32.xlu0 %v246, 126
    %v727 = vpop.permute.xlu0 %726
    %728 = vrot.lane.b32.xlu0 %v247, 126
    %v729 = vpop.permute.xlu0 %728
    %730 = vrot.lane.b32.xlu0 %v248, 126
    %v731 = vpop.permute.xlu0 %730
    %732 = vrot.lane.b32.xlu0 %v249, 126
    %v733 = vpop.permute.xlu0 %732
    %734 = vrot.lane.b32.xlu0 %v250, 126
    %v735 = vpop.permute.xlu0 %734
    %vm736 = vcmask 1031168
    %v737 = vsel %vm736, %v723, %v725
    %v738 = vsel %vm736, %v725, %v727
    %v739 = vsel %vm736, %v727, %v729
    %v740 = vsel %vm736, %v729, %v731
    %v741 = vsel %vm736, %v731, %v733
    %v742 = vsel %vm736, %v733, %v735
    %v750 = vsel %vm287, %v721, 0
    %752 = vmatprep.subr.mxu0 0.0
    %753 = vmatpush1.msra.mxu0 0.0
    %754 = vmatprep.subr.mxu0 0.0
    %755 = vmatpush1.msra.mxu0 0.0
    %756 = vmatprep.subr.mxu0 0.0
    %757 = vmatpush1.msra.mxu0 0.0
    %758 = vmatprep.subr.mxu0 0.0
    %759 = vmatpush1.msra.mxu0 0.0
    %760 = vmatprep.subr.mxu0 0.0
    %761 = vmatpush1.msra.mxu0 0.0
    %762 = vmatprep.subr.mxu0 0.0
    %763 = vmatpush1.msra.mxu0 0.0
    %764 = vmatprep.subr.mxu0 0.0
    %765 = vmatpush1.msra.mxu0 0.0
    %766 = vmatprep.subr.mxu0 0.0
    %767 = vmatpush1.msra.mxu0 0.0
    %768 = vmatprep.subr.mxu0 0.0
    %769 = vmatpush1.msra.mxu0 0.0
    %770 = vmatprep.subr.mxu0 0.0
    %771 = vmatpush1.msra.mxu0 0.0
    %772 = vmatprep.subr.mxu0 0.0
    %773 = vmatpush1.msra.mxu0 0.0
    %774 = vmatprep.subr.mxu0 0.0
    %775 = vmatpush1.msra.mxu0 0.0
    %776 = vmatprep.subr.mxu0 0.0
    %777 = vmatpush1.msra.mxu0 0.0
    %778 = vmatprep.subr.mxu0 0.0
    %779 = vmatpush1.msra.mxu0 0.0
    %780 = vmatprep.subr.mxu0 0.0
    %781 = vmatpush1.msra.mxu0 0.0
    %782 = vmatprep.subr.mxu0 %v738
    %783 = vmatpush1.msra.mxu0 %v737
    %784 = vmatprep.subr.mxu0 0.0
    %785 = vmatpush2.msra.mxu0 0.0
    %786 = vmatprep.subr.mxu0 0.0
    %787 = vmatpush2.msra.mxu0 0.0
    %788 = vmatprep.subr.mxu0 0.0
    %789 = vmatpush2.msra.mxu0 0.0
    %790 = vmatprep.subr.mxu0 0.0
    %791 = vmatpush2.msra.mxu0 0.0
    %792 = vmatprep.subr.mxu0 0.0
    %793 = vmatpush2.msra.mxu0 0.0
    %794 = vmatprep.subr.mxu0 0.0
    %795 = vmatpush2.msra.mxu0 0.0
    %796 = vmatprep.subr.mxu0 0.0
    %797 = vmatpush2.msra.mxu0 0.0
    %798 = vmatprep.subr.mxu0 0.0
    %799 = vmatpush2.msra.mxu0 0.0
    %800 = vmatprep.subr.mxu0 0.0
    %801 = vmatpush2.msra.mxu0 0.0
    %802 = vmatprep.subr.mxu0 0.0
    %803 = vmatpush2.msra.mxu0 0.0
    %804 = vmatprep.subr.mxu0 0.0
    %805 = vmatpush2.msra.mxu0 0.0
    %806 = vmatprep.subr.mxu0 0.0
    %807 = vmatpush2.msra.mxu0 0.0
    %808 = vmatprep.subr.mxu0 0.0
    %809 = vmatpush2.msra.mxu0 0.0
    %810 = vmatprep.subr.mxu0 0.0
    %811 = vmatpush2.msra.mxu0 0.0
    %812 = vmatprep.subr.mxu0 0.0
    %813 = vmatpush2.msra.mxu0 0.0
    %814 = vmatprep.subr.mxu0 0.0
    %815 = vmatpush2.msra.mxu0 0.0
    %816 = vmatprep.mubr.f32.mxu0 0.0
    %817 = vmatmul.mubr.f32.gmra.mxu0 %v750
    %v818 = vpop.f32.mrf.mxu0
    %v819 = vadd.f32 0.0, %v818
    %v820 = vpop.f32.mrf.mxu0
    %v821 = vadd.f32 0.0, %v820
    %822 = vdwg.mxu0
    %823 = vmatprep.subr.mxu0 0.0
    %824 = vmatpush1.msra.mxu0 0.0
    %825 = vmatprep.subr.mxu0 0.0
    %826 = vmatpush1.msra.mxu0 0.0
    %827 = vmatprep.subr.mxu0 0.0
    %828 = vmatpush1.msra.mxu0 0.0
    %829 = vmatprep.subr.mxu0 0.0
    %830 = vmatpush1.msra.mxu0 0.0
    %831 = vmatprep.subr.mxu0 0.0
    %832 = vmatpush1.msra.mxu0 0.0
    %833 = vmatprep.subr.mxu0 0.0
    %834 = vmatpush1.msra.mxu0 0.0
    %835 = vmatprep.subr.mxu0 0.0
    %836 = vmatpush1.msra.mxu0 0.0
    %837 = vmatprep.subr.mxu0 0.0
    %838 = vmatpush1.msra.mxu0 0.0
    %839 = vmatprep.subr.mxu0 0.0
    %840 = vmatpush1.msra.mxu0 0.0
    %841 = vmatprep.subr.mxu0 0.0
    %842 = vmatpush1.msra.mxu0 0.0
    %843 = vmatprep.subr.mxu0 0.0
    %844 = vmatpush1.msra.mxu0 0.0
    %845 = vmatprep.subr.mxu0 0.0
    %846 = vmatpush1.msra.mxu0 0.0
    %847 = vmatprep.subr.mxu0 0.0
    %848 = vmatpush1.msra.mxu0 0.0
    %849 = vmatprep.subr.mxu0 0.0
    %850 = vmatpush1.msra.mxu0 0.0
    %851 = vmatprep.subr.mxu0 0.0
    %852 = vmatpush1.msra.mxu0 0.0
    %853 = vmatprep.subr.mxu0 %v740
    %854 = vmatpush1.msra.mxu0 %v739
    %855 = vmatprep.subr.mxu0 0.0
    %856 = vmatpush2.msra.mxu0 0.0
    %857 = vmatprep.subr.mxu0 0.0
    %858 = vmatpush2.msra.mxu0 0.0
    %859 = vmatprep.subr.mxu0 0.0
    %860 = vmatpush2.msra.mxu0 0.0
    %861 = vmatprep.subr.mxu0 0.0
    %862 = vmatpush2.msra.mxu0 0.0
    %863 = vmatprep.subr.mxu0 0.0
    %864 = vmatpush2.msra.mxu0 0.0
    %865 = vmatprep.subr.mxu0 0.0
    %866 = vmatpush2.msra.mxu0 0.0
    %867 = vmatprep.subr.mxu0 0.0
    %868 = vmatpush2.msra.mxu0 0.0
    %869 = vmatprep.subr.mxu0 0.0
    %870 = vmatpush2.msra.mxu0 0.0
    %871 = vmatprep.subr.mxu0 0.0
    %872 = vmatpush2.msra.mxu0 0.0
    %873 = vmatprep.subr.mxu0 0.0
    %874 = vmatpush2.msra.mxu0 0.0
    %875 = vmatprep.subr.mxu0 0.0
    %876 = vmatpush2.msra.mxu0 0.0
    %877 = vmatprep.subr.mxu0 0.0
    %878 = vmatpush2.msra.mxu0 0.0
    %879 = vmatprep.subr.mxu0 0.0
    %880 = vmatpush2.msra.mxu0 0.0
    %881 = vmatprep.subr.mxu0 0.0
    %882 = vmatpush2.msra.mxu0 0.0
    %883 = vmatprep.subr.mxu0 0.0
    %884 = vmatpush2.msra.mxu0 0.0
    %885 = vmatprep.subr.mxu0 0.0
    %886 = vmatpush2.msra.mxu0 0.0
    %887 = vmatprep.mubr.f32.mxu0 0.0
    %888 = vmatmul.mubr.f32.gmra.mxu0 %v750
    %v889 = vpop.f32.mrf.mxu0
    %v890 = vadd.f32 0.0, %v889
    %v891 = vpop.f32.mrf.mxu0
    %v892 = vadd.f32 0.0, %v891
    %893 = vdwg.mxu0
    %894 = vmatprep.subr.mxu0 0.0
    %895 = vmatpush1.msra.mxu0 0.0
    %896 = vmatprep.subr.mxu0 0.0
    %897 = vmatpush1.msra.mxu0 0.0
    %898 = vmatprep.subr.mxu0 0.0
    %899 = vmatpush1.msra.mxu0 0.0
    %900 = vmatprep.subr.mxu0 0.0
    %901 = vmatpush1.msra.mxu0 0.0
    %902 = vmatprep.subr.mxu0 0.0
    %903 = vmatpush1.msra.mxu0 0.0
    %904 = vmatprep.subr.mxu0 0.0
    %905 = vmatpush1.msra.mxu0 0.0
    %906 = vmatprep.subr.mxu0 0.0
    %907 = vmatpush1.msra.mxu0 0.0
    %908 = vmatprep.subr.mxu0 0.0
    %909 = vmatpush1.msra.mxu0 0.0
    %910 = vmatprep.subr.mxu0 0.0
    %911 = vmatpush1.msra.mxu0 0.0
    %912 = vmatprep.subr.mxu0 0.0
    %913 = vmatpush1.msra.mxu0 0.0
    %914 = vmatprep.subr.mxu0 0.0
    %915 = vmatpush1.msra.mxu0 0.0
    %916 = vmatprep.subr.mxu0 0.0
    %917 = vmatpush1.msra.mxu0 0.0
    %918 = vmatprep.subr.mxu0 0.0
    %919 = vmatpush1.msra.mxu0 0.0
    %920 = vmatprep.subr.mxu0 0.0
    %921 = vmatpush1.msra.mxu0 0.0
    %922 = vmatprep.subr.mxu0 0.0
    %923 = vmatpush1.msra.mxu0 0.0
    %924 = vmatprep.subr.mxu0 %v742
    %925 = vmatpush1.msra.mxu0 %v741
    %926 = vmatprep.subr.mxu0 0.0
    %927 = vmatpush2.msra.mxu0 0.0
    %928 = vmatprep.subr.mxu0 0.0
    %929 = vmatpush2.msra.mxu0 0.0
    %930 = vmatprep.subr.mxu0 0.0
    %931 = vmatpush2.msra.mxu0 0.0
    %932 = vmatprep.subr.mxu0 0.0
    %933 = vmatpush2.msra.mxu0 0.0
    %934 = vmatprep.subr.mxu0 0.0
    %935 = vmatpush2.msra.mxu0 0.0
    %936 = vmatprep.subr.mxu0 0.0
    %937 = vmatpush2.msra.mxu0 0.0
    %938 = vmatprep.subr.mxu0 0.0
    %939 = vmatpush2.msra.mxu0 0.0
    %940 = vmatprep.subr.mxu0 0.0
    %941 = vmatpush2.msra.mxu0 0.0
    %942 = vmatprep.subr.mxu0 0.0
    %943 = vmatpush2.msra.mxu0 0.0
    %944 = vmatprep.subr.mxu0 0.0
    %945 = vmatpush2.msra.mxu0 0.0
    %946 = vmatprep.subr.mxu0 0.0
    %947 = vmatpush2.msra.mxu0 0.0
    %948 = vmatprep.subr.mxu0 0.0
    %949 = vmatpush2.msra.mxu0 0.0
    %950 = vmatprep.subr.mxu0 0.0
    %951 = vmatpush2.msra.mxu0 0.0
    %952 = vmatprep.subr.mxu0 0.0
    %953 = vmatpush2.msra.mxu0 0.0
    %954 = vmatprep.subr.mxu0 0.0
    %955 = vmatpush2.msra.mxu0 0.0
    %956 = vmatprep.subr.mxu0 0.0
    %957 = vmatpush2.msra.mxu0 0.0
    %958 = vmatprep.mubr.f32.mxu0 0.0
    %959 = vmatmul.mubr.f32.gmra.mxu0 %v750
    %v960 = vpop.f32.mrf.mxu0
    %v961 = vadd.f32 0.0, %v960
    %v962 = vpop.f32.mrf.mxu0
    %v963 = vadd.f32 0.0, %v962
    %964 = vdwg.mxu0
    %v965 = vadd.f32 %v574, %v819
    %v966 = vadd.f32 %v576, %v821
    %v967 = vadd.f32 %v645, %v890
    %v968 = vadd.f32 %v647, %v892
    %v969 = vadd.f32 %v716, %v961
    %v970 = vadd.f32 %v718, %v963
    %s971 = scalar_lea.vmem %s1, 24
    %v972 = vld [vmem:[%s971] sm:$0xff]
    %973 = vrot.lane.b32.xlu0 %v244, 110
    %v974 = vpop.permute.xlu0 %973
    %975 = vrot.lane.b32.xlu0 %v245, 110
    %v976 = vpop.permute.xlu0 %975
    %977 = vrot.lane.b32.xlu0 %v246, 110
    %v978 = vpop.permute.xlu0 %977
    %979 = vrot.lane.b32.xlu0 %v247, 110
    %v980 = vpop.permute.xlu0 %979
    %981 = vrot.lane.b32.xlu0 %v248, 110
    %v982 = vpop.permute.xlu0 %981
    %983 = vrot.lane.b32.xlu0 %v249, 110
    %v984 = vpop.permute.xlu0 %983
    %985 = vrot.lane.b32.xlu0 %v250, 110
    %v986 = vpop.permute.xlu0 %985
    %vm987 = vcmask 900096
    %v988 = vsel %vm987, %v974, %v976
    %v989 = vsel %vm987, %v976, %v978
    %v990 = vsel %vm987, %v978, %v980
    %v991 = vsel %vm987, %v980, %v982
    %v992 = vsel %vm987, %v982, %v984
    %v993 = vsel %vm987, %v984, %v986
    %v1001 = vsel %vm287, %v972, 0
    %1003 = vmatprep.subr.mxu0 0.0
    %1004 = vmatpush1.msra.mxu0 0.0
    %1005 = vmatprep.subr.mxu0 0.0
    %1006 = vmatpush1.msra.mxu0 0.0
    %1007 = vmatprep.subr.mxu0 0.0
    %1008 = vmatpush1.msra.mxu0 0.0
    %1009 = vmatprep.subr.mxu0 0.0
    %1010 = vmatpush1.msra.mxu0 0.0
    %1011 = vmatprep.subr.mxu0 0.0
    %1012 = vmatpush1.msra.mxu0 0.0
    %1013 = vmatprep.subr.mxu0 0.0
    %1014 = vmatpush1.msra.mxu0 0.0
    %1015 = vmatprep.subr.mxu0 0.0
    %1016 = vmatpush1.msra.mxu0 0.0
    %1017 = vmatprep.subr.mxu0 0.0
    %1018 = vmatpush1.msra.mxu0 0.0
    %1019 = vmatprep.subr.mxu0 0.0
    %1020 = vmatpush1.msra.mxu0 0.0
    %1021 = vmatprep.subr.mxu0 0.0
    %1022 = vmatpush1.msra.mxu0 0.0
    %1023 = vmatprep.subr.mxu0 0.0
    %1024 = vmatpush1.msra.mxu0 0.0
    %1025 = vmatprep.subr.mxu0 0.0
    %1026 = vmatpush1.msra.mxu0 0.0
    %1027 = vmatprep.subr.mxu0 0.0
    %1028 = vmatpush1.msra.mxu0 0.0
    %1029 = vmatprep.subr.mxu0 0.0
    %1030 = vmatpush1.msra.mxu0 0.0
    %1031 = vmatprep.subr.mxu0 0.0
    %1032 = vmatpush1.msra.mxu0 0.0
    %1033 = vmatprep.subr.mxu0 %v989
    %1034 = vmatpush1.msra.mxu0 %v988
    %1035 = vmatprep.subr.mxu0 0.0
    %1036 = vmatpush2.msra.mxu0 0.0
    %1037 = vmatprep.subr.mxu0 0.0
    %1038 = vmatpush2.msra.mxu0 0.0
    %1039 = vmatprep.subr.mxu0 0.0
    %1040 = vmatpush2.msra.mxu0 0.0
    %1041 = vmatprep.subr.mxu0 0.0
    %1042 = vmatpush2.msra.mxu0 0.0
    %1043 = vmatprep.subr.mxu0 0.0
    %1044 = vmatpush2.msra.mxu0 0.0
    %1045 = vmatprep.subr.mxu0 0.0
    %1046 = vmatpush2.msra.mxu0 0.0
    %1047 = vmatprep.subr.mxu0 0.0
    %1048 = vmatpush2.msra.mxu0 0.0
    %1049 = vmatprep.subr.mxu0 0.0
    %1050 = vmatpush2.msra.mxu0 0.0
    %1051 = vmatprep.subr.mxu0 0.0
    %1052 = vmatpush2.msra.mxu0 0.0
    %1053 = vmatprep.subr.mxu0 0.0
    %1054 = vmatpush2.msra.mxu0 0.0
    %1055 = vmatprep.subr.mxu0 0.0
    %1056 = vmatpush2.msra.mxu0 0.0
    %1057 = vmatprep.subr.mxu0 0.0
    %1058 = vmatpush2.msra.mxu0 0.0
    %1059 = vmatprep.subr.mxu0 0.0
    %1060 = vmatpush2.msra.mxu0 0.0
    %1061 = vmatprep.subr.mxu0 0.0
    %1062 = vmatpush2.msra.mxu0 0.0
    %1063 = vmatprep.subr.mxu0 0.0
    %1064 = vmatpush2.msra.mxu0 0.0
    %1065 = vmatprep.subr.mxu0 0.0
    %1066 = vmatpush2.msra.mxu0 0.0
    %1067 = vmatprep.mubr.f32.mxu0 0.0
    %1068 = vmatmul.mubr.f32.gmra.mxu0 %v1001
    %v1069 = vpop.f32.mrf.mxu0
    %v1070 = vadd.f32 0.0, %v1069
    %v1071 = vpop.f32.mrf.mxu0
    %v1072 = vadd.f32 0.0, %v1071
    %1073 = vdwg.mxu0
    %1074 = vmatprep.subr.mxu0 0.0
    %1075 = vmatpush1.msra.mxu0 0.0
    %1076 = vmatprep.subr.mxu0 0.0
    %1077 = vmatpush1.msra.mxu0 0.0
    %1078 = vmatprep.subr.mxu0 0.0
    %1079 = vmatpush1.msra.mxu0 0.0
    %1080 = vmatprep.subr.mxu0 0.0
    %1081 = vmatpush1.msra.mxu0 0.0
    %1082 = vmatprep.subr.mxu0 0.0
    %1083 = vmatpush1.msra.mxu0 0.0
    %1084 = vmatprep.subr.mxu0 0.0
    %1085 = vmatpush1.msra.mxu0 0.0
    %1086 = vmatprep.subr.mxu0 0.0
    %1087 = vmatpush1.msra.mxu0 0.0
    %1088 = vmatprep.subr.mxu0 0.0
    %1089 = vmatpush1.msra.mxu0 0.0
    %1090 = vmatprep.subr.mxu0 0.0
    %1091 = vmatpush1.msra.mxu0 0.0
    %1092 = vmatprep.subr.mxu0 0.0
    %1093 = vmatpush1.msra.mxu0 0.0
    %1094 = vmatprep.subr.mxu0 0.0
    %1095 = vmatpush1.msra.mxu0 0.0
    %1096 = vmatprep.subr.mxu0 0.0
    %1097 = vmatpush1.msra.mxu0 0.0
    %1098 = vmatprep.subr.mxu0 0.0
    %1099 = vmatpush1.msra.mxu0 0.0
    %1100 = vmatprep.subr.mxu0 0.0
    %1101 = vmatpush1.msra.mxu0 0.0
    %1102 = vmatprep.subr.mxu0 0.0
    %1103 = vmatpush1.msra.mxu0 0.0
    %1104 = vmatprep.subr.mxu0 %v991
    %1105 = vmatpush1.msra.mxu0 %v990
    %1106 = vmatprep.subr.mxu0 0.0
    %1107 = vmatpush2.msra.mxu0 0.0
    %1108 = vmatprep.subr.mxu0 0.0
    %1109 = vmatpush2.msra.mxu0 0.0
    %1110 = vmatprep.subr.mxu0 0.0
    %1111 = vmatpush2.msra.mxu0 0.0
    %1112 = vmatprep.subr.mxu0 0.0
    %1113 = vmatpush2.msra.mxu0 0.0
    %1114 = vmatprep.subr.mxu0 0.0
    %1115 = vmatpush2.msra.mxu0 0.0
    %1116 = vmatprep.subr.mxu0 0.0
    %1117 = vmatpush2.msra.mxu0 0.0
    %1118 = vmatprep.subr.mxu0 0.0
    %1119 = vmatpush2.msra.mxu0 0.0
    %1120 = vmatprep.subr.mxu0 0.0
    %1121 = vmatpush2.msra.mxu0 0.0
    %1122 = vmatprep.subr.mxu0 0.0
    %1123 = vmatpush2.msra.mxu0 0.0
    %1124 = vmatprep.subr.mxu0 0.0
    %1125 = vmatpush2.msra.mxu0 0.0
    %1126 = vmatprep.subr.mxu0 0.0
    %1127 = vmatpush2.msra.mxu0 0.0
    %1128 = vmatprep.subr.mxu0 0.0
    %1129 = vmatpush2.msra.mxu0 0.0
    %1130 = vmatprep.subr.mxu0 0.0
    %1131 = vmatpush2.msra.mxu0 0.0
    %1132 = vmatprep.subr.mxu0 0.0
    %1133 = vmatpush2.msra.mxu0 0.0
    %1134 = vmatprep.subr.mxu0 0.0
    %1135 = vmatpush2.msra.mxu0 0.0
    %1136 = vmatprep.subr.mxu0 0.0
    %1137 = vmatpush2.msra.mxu0 0.0
    %1138 = vmatprep.mubr.f32.mxu0 0.0
    %1139 = vmatmul.mubr.f32.gmra.mxu0 %v1001
    %v1140 = vpop.f32.mrf.mxu0
    %v1141 = vadd.f32 0.0, %v1140
    %v1142 = vpop.f32.mrf.mxu0
    %v1143 = vadd.f32 0.0, %v1142
    %1144 = vdwg.mxu0
    %1145 = vmatprep.subr.mxu0 0.0
    %1146 = vmatpush1.msra.mxu0 0.0
    %1147 = vmatprep.subr.mxu0 0.0
    %1148 = vmatpush1.msra.mxu0 0.0
    %1149 = vmatprep.subr.mxu0 0.0
    %1150 = vmatpush1.msra.mxu0 0.0
    %1151 = vmatprep.subr.mxu0 0.0
    %1152 = vmatpush1.msra.mxu0 0.0
    %1153 = vmatprep.subr.mxu0 0.0
    %1154 = vmatpush1.msra.mxu0 0.0
    %1155 = vmatprep.subr.mxu0 0.0
    %1156 = vmatpush1.msra.mxu0 0.0
    %1157 = vmatprep.subr.mxu0 0.0
    %1158 = vmatpush1.msra.mxu0 0.0
    %1159 = vmatprep.subr.mxu0 0.0
    %1160 = vmatpush1.msra.mxu0 0.0
    %1161 = vmatprep.subr.mxu0 0.0
    %1162 = vmatpush1.msra.mxu0 0.0
    %1163 = vmatprep.subr.mxu0 0.0
    %1164 = vmatpush1.msra.mxu0 0.0
    %1165 = vmatprep.subr.mxu0 0.0
    %1166 = vmatpush1.msra.mxu0 0.0
    %1167 = vmatprep.subr.mxu0 0.0
    %1168 = vmatpush1.msra.mxu0 0.0
    %1169 = vmatprep.subr.mxu0 0.0
    %1170 = vmatpush1.msra.mxu0 0.0
    %1171 = vmatprep.subr.mxu0 0.0
    %1172 = vmatpush1.msra.mxu0 0.0
    %1173 = vmatprep.subr.mxu0 0.0
    %1174 = vmatpush1.msra.mxu0 0.0
    %1175 = vmatprep.subr.mxu0 %v993
    %1176 = vmatpush1.msra.mxu0 %v992
    %1177 = vmatprep.subr.mxu0 0.0
    %1178 = vmatpush2.msra.mxu0 0.0
    %1179 = vmatprep.subr.mxu0 0.0
    %1180 = vmatpush2.msra.mxu0 0.0
    %1181 = vmatprep.subr.mxu0 0.0
    %1182 = vmatpush2.msra.mxu0 0.0
    %1183 = vmatprep.subr.mxu0 0.0
    %1184 = vmatpush2.msra.mxu0 0.0
    %1185 = vmatprep.subr.mxu0 0.0
    %1186 = vmatpush2.msra.mxu0 0.0
    %1187 = vmatprep.subr.mxu0 0.0
    %1188 = vmatpush2.msra.mxu0 0.0
    %1189 = vmatprep.subr.mxu0 0.0
    %1190 = vmatpush2.msra.mxu0 0.0
    %1191 = vmatprep.subr.mxu0 0.0
    %1192 = vmatpush2.msra.mxu0 0.0
    %1193 = vmatprep.subr.mxu0 0.0
    %1194 = vmatpush2.msra.mxu0 0.0
    %1195 = vmatprep.subr.mxu0 0.0
    %1196 = vmatpush2.msra.mxu0 0.0
    %1197 = vmatprep.subr.mxu0 0.0
    %1198 = vmatpush2.msra.mxu0 0.0
    %1199 = vmatprep.subr.mxu0 0.0
    %1200 = vmatpush2.msra.mxu0 0.0
    %1201 = vmatprep.subr.mxu0 0.0
    %1202 = vmatpush2.msra.mxu0 0.0
    %1203 = vmatprep.subr.mxu0 0.0
    %1204 = vmatpush2.msra.mxu0 0.0
    %1205 = vmatprep.subr.mxu0 0.0
    %1206 = vmatpush2.msra.mxu0 0.0
    %1207 = vmatprep.subr.mxu0 0.0
    %1208 = vmatpush2.msra.mxu0 0.0
    %1209 = vmatprep.mubr.f32.mxu0 0.0
    %1210 = vmatmul.mubr.f32.gmra.mxu0 %v1001
    %v1211 = vpop.f32.mrf.mxu0
    %v1212 = vadd.f32 0.0, %v1211
    %v1213 = vpop.f32.mrf.mxu0
    %v1214 = vadd.f32 0.0, %v1213
    %1215 = vdwg.mxu0
    %v1216 = vadd.f32 %v965, %v1070
    %v1217 = vadd.f32 %v966, %v1072
    %v1218 = vadd.f32 %v967, %v1141
    %v1219 = vadd.f32 %v968, %v1143
    %v1220 = vadd.f32 %v969, %v1212
    %v1221 = vadd.f32 %v970, %v1214
    %s1222 = scalar_lea.vmem %s1, 32
    %v1223 = vld [vmem:[%s1222] sm:$0xff]
    %1224 = vrot.lane.b32.xlu0 %v244, 109
    %v1225 = vpop.permute.xlu0 %1224
    %1226 = vrot.lane.b32.xlu0 %v245, 109
    %v1227 = vpop.permute.xlu0 %1226
    %1228 = vrot.lane.b32.xlu0 %v246, 109
    %v1229 = vpop.permute.xlu0 %1228
    %1230 = vrot.lane.b32.xlu0 %v247, 109
    %v1231 = vpop.permute.xlu0 %1230
    %1232 = vrot.lane.b32.xlu0 %v248, 109
    %v1233 = vpop.permute.xlu0 %1232
    %1234 = vrot.lane.b32.xlu0 %v249, 109
    %v1235 = vpop.permute.xlu0 %1234
    %1236 = vrot.lane.b32.xlu0 %v250, 109
    %v1237 = vpop.permute.xlu0 %1236
    %vm1238 = vcmask 891904
    %v1239 = vsel %vm1238, %v1225, %v1227
    %v1240 = vsel %vm1238, %v1227, %v1229
    %v1241 = vsel %vm1238, %v1229, %v1231
    %v1242 = vsel %vm1238, %v1231, %v1233
    %v1243 = vsel %vm1238, %v1233, %v1235
    %v1244 = vsel %vm1238, %v1235, %v1237
    %v1252 = vsel %vm287, %v1223, 0
    %1254 = vmatprep.subr.mxu0 0.0
    %1255 = vmatpush1.msra.mxu0 0.0
    %1256 = vmatprep.subr.mxu0 0.0
    %1257 = vmatpush1.msra.mxu0 0.0
    %1258 = vmatprep.subr.mxu0 0.0
    %1259 = vmatpush1.msra.mxu0 0.0
    %1260 = vmatprep.subr.mxu0 0.0
    %1261 = vmatpush1.msra.mxu0 0.0
    %1262 = vmatprep.subr.mxu0 0.0
    %1263 = vmatpush1.msra.mxu0 0.0
    %1264 = vmatprep.subr.mxu0 0.0
    %1265 = vmatpush1.msra.mxu0 0.0
    %1266 = vmatprep.subr.mxu0 0.0
    %1267 = vmatpush1.msra.mxu0 0.0
    %1268 = vmatprep.subr.mxu0 0.0
    %1269 = vmatpush1.msra.mxu0 0.0
    %1270 = vmatprep.subr.mxu0 0.0
    %1271 = vmatpush1.msra.mxu0 0.0
    %1272 = vmatprep.subr.mxu0 0.0
    %1273 = vmatpush1.msra.mxu0 0.0
    %1274 = vmatprep.subr.mxu0 0.0
    %1275 = vmatpush1.msra.mxu0 0.0
    %1276 = vmatprep.subr.mxu0 0.0
    %1277 = vmatpush1.msra.mxu0 0.0
    %1278 = vmatprep.subr.mxu0 0.0
    %1279 = vmatpush1.msra.mxu0 0.0
    %1280 = vmatprep.subr.mxu0 0.0
    %1281 = vmatpush1.msra.mxu0 0.0
    %1282 = vmatprep.subr.mxu0 0.0
    %1283 = vmatpush1.msra.mxu0 0.0
    %1284 = vmatprep.subr.mxu0 %v1240
    %1285 = vmatpush1.msra.mxu0 %v1239
    %1286 = vmatprep.subr.mxu0 0.0
    %1287 = vmatpush2.msra.mxu0 0.0
    %1288 = vmatprep.subr.mxu0 0.0
    %1289 = vmatpush2.msra.mxu0 0.0
    %1290 = vmatprep.subr.mxu0 0.0
    %1291 = vmatpush2.msra.mxu0 0.0
    %1292 = vmatprep.subr.mxu0 0.0
    %1293 = vmatpush2.msra.mxu0 0.0
    %1294 = vmatprep.subr.mxu0 0.0
    %1295 = vmatpush2.msra.mxu0 0.0
    %1296 = vmatprep.subr.mxu0 0.0
    %1297 = vmatpush2.msra.mxu0 0.0
    %1298 = vmatprep.subr.mxu0 0.0
    %1299 = vmatpush2.msra.mxu0 0.0
    %1300 = vmatprep.subr.mxu0 0.0
    %1301 = vmatpush2.msra.mxu0 0.0
    %1302 = vmatprep.subr.mxu0 0.0
    %1303 = vmatpush2.msra.mxu0 0.0
    %1304 = vmatprep.subr.mxu0 0.0
    %1305 = vmatpush2.msra.mxu0 0.0
    %1306 = vmatprep.subr.mxu0 0.0
    %1307 = vmatpush2.msra.mxu0 0.0
    %1308 = vmatprep.subr.mxu0 0.0
    %1309 = vmatpush2.msra.mxu0 0.0
    %1310 = vmatprep.subr.mxu0 0.0
    %1311 = vmatpush2.msra.mxu0 0.0
    %1312 = vmatprep.subr.mxu0 0.0
    %1313 = vmatpush2.msra.mxu0 0.0
    %1314 = vmatprep.subr.mxu0 0.0
    %1315 = vmatpush2.msra.mxu0 0.0
    %1316 = vmatprep.subr.mxu0 0.0
    %1317 = vmatpush2.msra.mxu0 0.0
    %1318 = vmatprep.mubr.f32.mxu0 0.0
    %1319 = vmatmul.mubr.f32.gmra.mxu0 %v1252
    %v1320 = vpop.f32.mrf.mxu0
    %v1321 = vadd.f32 0.0, %v1320
    %v1322 = vpop.f32.mrf.mxu0
    %v1323 = vadd.f32 0.0, %v1322
    %1324 = vdwg.mxu0
    %1325 = vmatprep.subr.mxu0 0.0
    %1326 = vmatpush1.msra.mxu0 0.0
    %1327 = vmatprep.subr.mxu0 0.0
    %1328 = vmatpush1.msra.mxu0 0.0
    %1329 = vmatprep.subr.mxu0 0.0
    %1330 = vmatpush1.msra.mxu0 0.0
    %1331 = vmatprep.subr.mxu0 0.0
    %1332 = vmatpush1.msra.mxu0 0.0
    %1333 = vmatprep.subr.mxu0 0.0
    %1334 = vmatpush1.msra.mxu0 0.0
    %1335 = vmatprep.subr.mxu0 0.0
    %1336 = vmatpush1.msra.mxu0 0.0
    %1337 = vmatprep.subr.mxu0 0.0
    %1338 = vmatpush1.msra.mxu0 0.0
    %1339 = vmatprep.subr.mxu0 0.0
    %1340 = vmatpush1.msra.mxu0 0.0
    %1341 = vmatprep.subr.mxu0 0.0
    %1342 = vmatpush1.msra.mxu0 0.0
    %1343 = vmatprep.subr.mxu0 0.0
    %1344 = vmatpush1.msra.mxu0 0.0
    %1345 = vmatprep.subr.mxu0 0.0
    %1346 = vmatpush1.msra.mxu0 0.0
    %1347 = vmatprep.subr.mxu0 0.0
    %1348 = vmatpush1.msra.mxu0 0.0
    %1349 = vmatprep.subr.mxu0 0.0
    %1350 = vmatpush1.msra.mxu0 0.0
    %1351 = vmatprep.subr.mxu0 0.0
    %1352 = vmatpush1.msra.mxu0 0.0
    %1353 = vmatprep.subr.mxu0 0.0
    %1354 = vmatpush1.msra.mxu0 0.0
    %1355 = vmatprep.subr.mxu0 %v1242
    %1356 = vmatpush1.msra.mxu0 %v1241
    %1357 = vmatprep.subr.mxu0 0.0
    %1358 = vmatpush2.msra.mxu0 0.0
    %1359 = vmatprep.subr.mxu0 0.0
    %1360 = vmatpush2.msra.mxu0 0.0
    %1361 = vmatprep.subr.mxu0 0.0
    %1362 = vmatpush2.msra.mxu0 0.0
    %1363 = vmatprep.subr.mxu0 0.0
    %1364 = vmatpush2.msra.mxu0 0.0
    %1365 = vmatprep.subr.mxu0 0.0
    %1366 = vmatpush2.msra.mxu0 0.0
    %1367 = vmatprep.subr.mxu0 0.0
    %1368 = vmatpush2.msra.mxu0 0.0
    %1369 = vmatprep.subr.mxu0 0.0
    %1370 = vmatpush2.msra.mxu0 0.0
    %1371 = vmatprep.subr.mxu0 0.0
    %1372 = vmatpush2.msra.mxu0 0.0
    %1373 = vmatprep.subr.mxu0 0.0
    %1374 = vmatpush2.msra.mxu0 0.0
    %1375 = vmatprep.subr.mxu0 0.0
    %1376 = vmatpush2.msra.mxu0 0.0
    %1377 = vmatprep.subr.mxu0 0.0
    %1378 = vmatpush2.msra.mxu0 0.0
    %1379 = vmatprep.subr.mxu0 0.0
    %1380 = vmatpush2.msra.mxu0 0.0
    %1381 = vmatprep.subr.mxu0 0.0
    %1382 = vmatpush2.msra.mxu0 0.0
    %1383 = vmatprep.subr.mxu0 0.0
    %1384 = vmatpush2.msra.mxu0 0.0
    %1385 = vmatprep.subr.mxu0 0.0
    %1386 = vmatpush2.msra.mxu0 0.0
    %1387 = vmatprep.subr.mxu0 0.0
    %1388 = vmatpush2.msra.mxu0 0.0
    %1389 = vmatprep.mubr.f32.mxu0 0.0
    %1390 = vmatmul.mubr.f32.gmra.mxu0 %v1252
    %v1391 = vpop.f32.mrf.mxu0
    %v1392 = vadd.f32 0.0, %v1391
    %v1393 = vpop.f32.mrf.mxu0
    %v1394 = vadd.f32 0.0, %v1393
    %1395 = vdwg.mxu0
    %1396 = vmatprep.subr.mxu0 0.0
    %1397 = vmatpush1.msra.mxu0 0.0
    %1398 = vmatprep.subr.mxu0 0.0
    %1399 = vmatpush1.msra.mxu0 0.0
    %1400 = vmatprep.subr.mxu0 0.0
    %1401 = vmatpush1.msra.mxu0 0.0
    %1402 = vmatprep.subr.mxu0 0.0
    %1403 = vmatpush1.msra.mxu0 0.0
    %1404 = vmatprep.subr.mxu0 0.0
    %1405 = vmatpush1.msra.mxu0 0.0
    %1406 = vmatprep.subr.mxu0 0.0
    %1407 = vmatpush1.msra.mxu0 0.0
    %1408 = vmatprep.subr.mxu0 0.0
    %1409 = vmatpush1.msra.mxu0 0.0
    %1410 = vmatprep.subr.mxu0 0.0
    %1411 = vmatpush1.msra.mxu0 0.0
    %1412 = vmatprep.subr.mxu0 0.0
    %1413 = vmatpush1.msra.mxu0 0.0
    %1414 = vmatprep.subr.mxu0 0.0
    %1415 = vmatpush1.msra.mxu0 0.0
    %1416 = vmatprep.subr.mxu0 0.0
    %1417 = vmatpush1.msra.mxu0 0.0
    %1418 = vmatprep.subr.mxu0 0.0
    %1419 = vmatpush1.msra.mxu0 0.0
    %1420 = vmatprep.subr.mxu0 0.0
    %1421 = vmatpush1.msra.mxu0 0.0
    %1422 = vmatprep.subr.mxu0 0.0
    %1423 = vmatpush1.msra.mxu0 0.0
    %1424 = vmatprep.subr.mxu0 0.0
    %1425 = vmatpush1.msra.mxu0 0.0
    %1426 = vmatprep.subr.mxu0 %v1244
    %1427 = vmatpush1.msra.mxu0 %v1243
    %1428 = vmatprep.subr.mxu0 0.0
    %1429 = vmatpush2.msra.mxu0 0.0
    %1430 = vmatprep.subr.mxu0 0.0
    %1431 = vmatpush2.msra.mxu0 0.0
    %1432 = vmatprep.subr.mxu0 0.0
    %1433 = vmatpush2.msra.mxu0 0.0
    %1434 = vmatprep.subr.mxu0 0.0
    %1435 = vmatpush2.msra.mxu0 0.0
    %1436 = vmatprep.subr.mxu0 0.0
    %1437 = vmatpush2.msra.mxu0 0.0
    %1438 = vmatprep.subr.mxu0 0.0
    %1439 = vmatpush2.msra.mxu0 0.0
    %1440 = vmatprep.subr.mxu0 0.0
    %1441 = vmatpush2.msra.mxu0 0.0
    %1442 = vmatprep.subr.mxu0 0.0
    %1443 = vmatpush2.msra.mxu0 0.0
    %1444 = vmatprep.subr.mxu0 0.0
    %1445 = vmatpush2.msra.mxu0 0.0
    %1446 = vmatprep.subr.mxu0 0.0
    %1447 = vmatpush2.msra.mxu0 0.0
    %1448 = vmatprep.subr.mxu0 0.0
    %1449 = vmatpush2.msra.mxu0 0.0
    %1450 = vmatprep.subr.mxu0 0.0
    %1451 = vmatpush2.msra.mxu0 0.0
    %1452 = vmatprep.subr.mxu0 0.0
    %1453 = vmatpush2.msra.mxu0 0.0
    %1454 = vmatprep.subr.mxu0 0.0
    %1455 = vmatpush2.msra.mxu0 0.0
    %1456 = vmatprep.subr.mxu0 0.0
    %1457 = vmatpush2.msra.mxu0 0.0
    %1458 = vmatprep.subr.mxu0 0.0
    %1459 = vmatpush2.msra.mxu0 0.0
    %1460 = vmatprep.mubr.f32.mxu0 0.0
    %1461 = vmatmul.mubr.f32.gmra.mxu0 %v1252
    %v1462 = vpop.f32.mrf.mxu0
    %v1463 = vadd.f32 0.0, %v1462
    %v1464 = vpop.f32.mrf.mxu0
    %v1465 = vadd.f32 0.0, %v1464
    %1466 = vdwg.mxu0
    %v1467 = vadd.f32 %v1216, %v1321
    %v1468 = vadd.f32 %v1217, %v1323
    %v1469 = vadd.f32 %v1218, %v1392
    %v1470 = vadd.f32 %v1219, %v1394
    %v1471 = vadd.f32 %v1220, %v1463
    %v1472 = vadd.f32 %v1221, %v1465
    %s1473 = scalar_lea.vmem %s1, 40
    %v1474 = vld [vmem:[%s1473] sm:$0xff]
    %1475 = vrot.lane.b32.xlu0 %v244, 108
    %v1476 = vpop.permute.xlu0 %1475
    %1477 = vrot.lane.b32.xlu0 %v245, 108
    %v1478 = vpop.permute.xlu0 %1477
    %1479 = vrot.lane.b32.xlu0 %v246, 108
    %v1480 = vpop.permute.xlu0 %1479
    %1481 = vrot.lane.b32.xlu0 %v247, 108
    %v1482 = vpop.permute.xlu0 %1481
    %1483 = vrot.lane.b32.xlu0 %v248, 108
    %v1484 = vpop.permute.xlu0 %1483
    %1485 = vrot.lane.b32.xlu0 %v249, 108
    %v1486 = vpop.permute.xlu0 %1485
    %1487 = vrot.lane.b32.xlu0 %v250, 108
    %v1488 = vpop.permute.xlu0 %1487
    %vm1489 = vcmask 883712
    %v1490 = vsel %vm1489, %v1476, %v1478
    %v1491 = vsel %vm1489, %v1478, %v1480
    %v1492 = vsel %vm1489, %v1480, %v1482
    %v1493 = vsel %vm1489, %v1482, %v1484
    %v1494 = vsel %vm1489, %v1484, %v1486
    %v1495 = vsel %vm1489, %v1486, %v1488
    %v1503 = vsel %vm287, %v1474, 0
    %1505 = vmatprep.subr.mxu0 0.0
    %1506 = vmatpush1.msra.mxu0 0.0
    %1507 = vmatprep.subr.mxu0 0.0
    %1508 = vmatpush1.msra.mxu0 0.0
    %1509 = vmatprep.subr.mxu0 0.0
    %1510 = vmatpush1.msra.mxu0 0.0
    %1511 = vmatprep.subr.mxu0 0.0
    %1512 = vmatpush1.msra.mxu0 0.0
    %1513 = vmatprep.subr.mxu0 0.0
    %1514 = vmatpush1.msra.mxu0 0.0
    %1515 = vmatprep.subr.mxu0 0.0
    %1516 = vmatpush1.msra.mxu0 0.0
    %1517 = vmatprep.subr.mxu0 0.0
    %1518 = vmatpush1.msra.mxu0 0.0
    %1519 = vmatprep.subr.mxu0 0.0
    %1520 = vmatpush1.msra.mxu0 0.0
    %1521 = vmatprep.subr.mxu0 0.0
    %1522 = vmatpush1.msra.mxu0 0.0
    %1523 = vmatprep.subr.mxu0 0.0
    %1524 = vmatpush1.msra.mxu0 0.0
    %1525 = vmatprep.subr.mxu0 0.0
    %1526 = vmatpush1.msra.mxu0 0.0
    %1527 = vmatprep.subr.mxu0 0.0
    %1528 = vmatpush1.msra.mxu0 0.0
    %1529 = vmatprep.subr.mxu0 0.0
    %1530 = vmatpush1.msra.mxu0 0.0
    %1531 = vmatprep.subr.mxu0 0.0
    %1532 = vmatpush1.msra.mxu0 0.0
    %1533 = vmatprep.subr.mxu0 0.0
    %1534 = vmatpush1.msra.mxu0 0.0
    %1535 = vmatprep.subr.mxu0 %v1491
    %1536 = vmatpush1.msra.mxu0 %v1490
    %1537 = vmatprep.subr.mxu0 0.0
    %1538 = vmatpush2.msra.mxu0 0.0
    %1539 = vmatprep.subr.mxu0 0.0
    %1540 = vmatpush2.msra.mxu0 0.0
    %1541 = vmatprep.subr.mxu0 0.0
    %1542 = vmatpush2.msra.mxu0 0.0
    %1543 = vmatprep.subr.mxu0 0.0
    %1544 = vmatpush2.msra.mxu0 0.0
    %1545 = vmatprep.subr.mxu0 0.0
    %1546 = vmatpush2.msra.mxu0 0.0
    %1547 = vmatprep.subr.mxu0 0.0
    %1548 = vmatpush2.msra.mxu0 0.0
    %1549 = vmatprep.subr.mxu0 0.0
    %1550 = vmatpush2.msra.mxu0 0.0
    %1551 = vmatprep.subr.mxu0 0.0
    %1552 = vmatpush2.msra.mxu0 0.0
    %1553 = vmatprep.subr.mxu0 0.0
    %1554 = vmatpush2.msra.mxu0 0.0
    %1555 = vmatprep.subr.mxu0 0.0
    %1556 = vmatpush2.msra.mxu0 0.0
    %1557 = vmatprep.subr.mxu0 0.0
    %1558 = vmatpush2.msra.mxu0 0.0
    %1559 = vmatprep.subr.mxu0 0.0
    %1560 = vmatpush2.msra.mxu0 0.0
    %1561 = vmatprep.subr.mxu0 0.0
    %1562 = vmatpush2.msra.mxu0 0.0
    %1563 = vmatprep.subr.mxu0 0.0
    %1564 = vmatpush2.msra.mxu0 0.0
    %1565 = vmatprep.subr.mxu0 0.0
    %1566 = vmatpush2.msra.mxu0 0.0
    %1567 = vmatprep.subr.mxu0 0.0
    %1568 = vmatpush2.msra.mxu0 0.0
    %1569 = vmatprep.mubr.f32.mxu0 0.0
    %1570 = vmatmul.mubr.f32.gmra.mxu0 %v1503
    %v1571 = vpop.f32.mrf.mxu0
    %v1572 = vadd.f32 0.0, %v1571
    %v1573 = vpop.f32.mrf.mxu0
    %v1574 = vadd.f32 0.0, %v1573
    %1575 = vdwg.mxu0
    %1576 = vmatprep.subr.mxu0 0.0
    %1577 = vmatpush1.msra.mxu0 0.0
    %1578 = vmatprep.subr.mxu0 0.0
    %1579 = vmatpush1.msra.mxu0 0.0
    %1580 = vmatprep.subr.mxu0 0.0
    %1581 = vmatpush1.msra.mxu0 0.0
    %1582 = vmatprep.subr.mxu0 0.0
    %1583 = vmatpush1.msra.mxu0 0.0
    %1584 = vmatprep.subr.mxu0 0.0
    %1585 = vmatpush1.msra.mxu0 0.0
    %1586 = vmatprep.subr.mxu0 0.0
    %1587 = vmatpush1.msra.mxu0 0.0
    %1588 = vmatprep.subr.mxu0 0.0
    %1589 = vmatpush1.msra.mxu0 0.0
    %1590 = vmatprep.subr.mxu0 0.0
    %1591 = vmatpush1.msra.mxu0 0.0
    %1592 = vmatprep.subr.mxu0 0.0
    %1593 = vmatpush1.msra.mxu0 0.0
    %1594 = vmatprep.subr.mxu0 0.0
    %1595 = vmatpush1.msra.mxu0 0.0
    %1596 = vmatprep.subr.mxu0 0.0
    %1597 = vmatpush1.msra.mxu0 0.0
    %1598 = vmatprep.subr.mxu0 0.0
    %1599 = vmatpush1.msra.mxu0 0.0
    %1600 = vmatprep.subr.mxu0 0.0
    %1601 = vmatpush1.msra.mxu0 0.0
    %1602 = vmatprep.subr.mxu0 0.0
    %1603 = vmatpush1.msra.mxu0 0.0
    %1604 = vmatprep.subr.mxu0 0.0
    %1605 = vmatpush1.msra.mxu0 0.0
    %1606 = vmatprep.subr.mxu0 %v1493
    %1607 = vmatpush1.msra.mxu0 %v1492
    %1608 = vmatprep.subr.mxu0 0.0
    %1609 = vmatpush2.msra.mxu0 0.0
    %1610 = vmatprep.subr.mxu0 0.0
    %1611 = vmatpush2.msra.mxu0 0.0
    %1612 = vmatprep.subr.mxu0 0.0
    %1613 = vmatpush2.msra.mxu0 0.0
    %1614 = vmatprep.subr.mxu0 0.0
    %1615 = vmatpush2.msra.mxu0 0.0
    %1616 = vmatprep.subr.mxu0 0.0
    %1617 = vmatpush2.msra.mxu0 0.0
    %1618 = vmatprep.subr.mxu0 0.0
    %1619 = vmatpush2.msra.mxu0 0.0
    %1620 = vmatprep.subr.mxu0 0.0
    %1621 = vmatpush2.msra.mxu0 0.0
    %1622 = vmatprep.subr.mxu0 0.0
    %1623 = vmatpush2.msra.mxu0 0.0
    %1624 = vmatprep.subr.mxu0 0.0
    %1625 = vmatpush2.msra.mxu0 0.0
    %1626 = vmatprep.subr.mxu0 0.0
    %1627 = vmatpush2.msra.mxu0 0.0
    %1628 = vmatprep.subr.mxu0 0.0
    %1629 = vmatpush2.msra.mxu0 0.0
    %1630 = vmatprep.subr.mxu0 0.0
    %1631 = vmatpush2.msra.mxu0 0.0
    %1632 = vmatprep.subr.mxu0 0.0
    %1633 = vmatpush2.msra.mxu0 0.0
    %1634 = vmatprep.subr.mxu0 0.0
    %1635 = vmatpush2.msra.mxu0 0.0
    %1636 = vmatprep.subr.mxu0 0.0
    %1637 = vmatpush2.msra.mxu0 0.0
    %1638 = vmatprep.subr.mxu0 0.0
    %1639 = vmatpush2.msra.mxu0 0.0
    %1640 = vmatprep.mubr.f32.mxu0 0.0
    %1641 = vmatmul.mubr.f32.gmra.mxu0 %v1503
    %v1642 = vpop.f32.mrf.mxu0
    %v1643 = vadd.f32 0.0, %v1642
    %v1644 = vpop.f32.mrf.mxu0
    %v1645 = vadd.f32 0.0, %v1644
    %1646 = vdwg.mxu0
    %1647 = vmatprep.subr.mxu0 0.0
    %1648 = vmatpush1.msra.mxu0 0.0
    %1649 = vmatprep.subr.mxu0 0.0
    %1650 = vmatpush1.msra.mxu0 0.0
    %1651 = vmatprep.subr.mxu0 0.0
    %1652 = vmatpush1.msra.mxu0 0.0
    %1653 = vmatprep.subr.mxu0 0.0
    %1654 = vmatpush1.msra.mxu0 0.0
    %1655 = vmatprep.subr.mxu0 0.0
    %1656 = vmatpush1.msra.mxu0 0.0
    %1657 = vmatprep.subr.mxu0 0.0
    %1658 = vmatpush1.msra.mxu0 0.0
    %1659 = vmatprep.subr.mxu0 0.0
    %1660 = vmatpush1.msra.mxu0 0.0
    %1661 = vmatprep.subr.mxu0 0.0
    %1662 = vmatpush1.msra.mxu0 0.0
    %1663 = vmatprep.subr.mxu0 0.0
    %1664 = vmatpush1.msra.mxu0 0.0
    %1665 = vmatprep.subr.mxu0 0.0
    %1666 = vmatpush1.msra.mxu0 0.0
    %1667 = vmatprep.subr.mxu0 0.0
    %1668 = vmatpush1.msra.mxu0 0.0
    %1669 = vmatprep.subr.mxu0 0.0
    %1670 = vmatpush1.msra.mxu0 0.0
    %1671 = vmatprep.subr.mxu0 0.0
    %1672 = vmatpush1.msra.mxu0 0.0
    %1673 = vmatprep.subr.mxu0 0.0
    %1674 = vmatpush1.msra.mxu0 0.0
    %1675 = vmatprep.subr.mxu0 0.0
    %1676 = vmatpush1.msra.mxu0 0.0
    %1677 = vmatprep.subr.mxu0 %v1495
    %1678 = vmatpush1.msra.mxu0 %v1494
    %1679 = vmatprep.subr.mxu0 0.0
    %1680 = vmatpush2.msra.mxu0 0.0
    %1681 = vmatprep.subr.mxu0 0.0
    %1682 = vmatpush2.msra.mxu0 0.0
    %1683 = vmatprep.subr.mxu0 0.0
    %1684 = vmatpush2.msra.mxu0 0.0
    %1685 = vmatprep.subr.mxu0 0.0
    %1686 = vmatpush2.msra.mxu0 0.0
    %1687 = vmatprep.subr.mxu0 0.0
    %1688 = vmatpush2.msra.mxu0 0.0
    %1689 = vmatprep.subr.mxu0 0.0
    %1690 = vmatpush2.msra.mxu0 0.0
    %1691 = vmatprep.subr.mxu0 0.0
    %1692 = vmatpush2.msra.mxu0 0.0
    %1693 = vmatprep.subr.mxu0 0.0
    %1694 = vmatpush2.msra.mxu0 0.0
    %1695 = vmatprep.subr.mxu0 0.0
    %1696 = vmatpush2.msra.mxu0 0.0
    %1697 = vmatprep.subr.mxu0 0.0
    %1698 = vmatpush2.msra.mxu0 0.0
    %1699 = vmatprep.subr.mxu0 0.0
    %1700 = vmatpush2.msra.mxu0 0.0
    %1701 = vmatprep.subr.mxu0 0.0
    %1702 = vmatpush2.msra.mxu0 0.0
    %1703 = vmatprep.subr.mxu0 0.0
    %1704 = vmatpush2.msra.mxu0 0.0
    %1705 = vmatprep.subr.mxu0 0.0
    %1706 = vmatpush2.msra.mxu0 0.0
    %1707 = vmatprep.subr.mxu0 0.0
    %1708 = vmatpush2.msra.mxu0 0.0
    %1709 = vmatprep.subr.mxu0 0.0
    %1710 = vmatpush2.msra.mxu0 0.0
    %1711 = vmatprep.mubr.f32.mxu0 0.0
    %1712 = vmatmul.mubr.f32.gmra.mxu0 %v1503
    %v1713 = vpop.f32.mrf.mxu0
    %v1714 = vadd.f32 0.0, %v1713
    %v1715 = vpop.f32.mrf.mxu0
    %v1716 = vadd.f32 0.0, %v1715
    %1717 = vdwg.mxu0
    %v1718 = vadd.f32 %v1467, %v1572
    %v1719 = vadd.f32 %v1468, %v1574
    %v1720 = vadd.f32 %v1469, %v1643
    %v1721 = vadd.f32 %v1470, %v1645
    %v1722 = vadd.f32 %v1471, %v1714
    %v1723 = vadd.f32 %v1472, %v1716
    %s1724 = scalar_lea.vmem %s1, 48
    %v1725 = vld [vmem:[%s1724] sm:$0xff]
    %1726 = vrot.lane.b32.xlu0 %v244, 92
    %v1727 = vpop.permute.xlu0 %1726
    %1728 = vrot.lane.b32.xlu0 %v245, 92
    %v1729 = vpop.permute.xlu0 %1728
    %1730 = vrot.lane.b32.xlu0 %v246, 92
    %v1731 = vpop.permute.xlu0 %1730
    %1732 = vrot.lane.b32.xlu0 %v247, 92
    %v1733 = vpop.permute.xlu0 %1732
    %1734 = vrot.lane.b32.xlu0 %v248, 92
    %v1735 = vpop.permute.xlu0 %1734
    %1736 = vrot.lane.b32.xlu0 %v249, 92
    %v1737 = vpop.permute.xlu0 %1736
    %1738 = vrot.lane.b32.xlu0 %v250, 92
    %v1739 = vpop.permute.xlu0 %1738
    %vm1740 = vcmask 752640
    %v1741 = vsel %vm1740, %v1727, %v1729
    %v1742 = vsel %vm1740, %v1729, %v1731
    %v1743 = vsel %vm1740, %v1731, %v1733
    %v1744 = vsel %vm1740, %v1733, %v1735
    %v1745 = vsel %vm1740, %v1735, %v1737
    %v1746 = vsel %vm1740, %v1737, %v1739
    %v1754 = vsel %vm287, %v1725, 0
    %1756 = vmatprep.subr.mxu0 0.0
    %1757 = vmatpush1.msra.mxu0 0.0
    %1758 = vmatprep.subr.mxu0 0.0
    %1759 = vmatpush1.msra.mxu0 0.0
    %1760 = vmatprep.subr.mxu0 0.0
    %1761 = vmatpush1.msra.mxu0 0.0
    %1762 = vmatprep.subr.mxu0 0.0
    %1763 = vmatpush1.msra.mxu0 0.0
    %1764 = vmatprep.subr.mxu0 0.0
    %1765 = vmatpush1.msra.mxu0 0.0
    %1766 = vmatprep.subr.mxu0 0.0
    %1767 = vmatpush1.msra.mxu0 0.0
    %1768 = vmatprep.subr.mxu0 0.0
    %1769 = vmatpush1.msra.mxu0 0.0
    %1770 = vmatprep.subr.mxu0 0.0
    %1771 = vmatpush1.msra.mxu0 0.0
    %1772 = vmatprep.subr.mxu0 0.0
    %1773 = vmatpush1.msra.mxu0 0.0
    %1774 = vmatprep.subr.mxu0 0.0
    %1775 = vmatpush1.msra.mxu0 0.0
    %1776 = vmatprep.subr.mxu0 0.0
    %1777 = vmatpush1.msra.mxu0 0.0
    %1778 = vmatprep.subr.mxu0 0.0
    %1779 = vmatpush1.msra.mxu0 0.0
    %1780 = vmatprep.subr.mxu0 0.0
    %1781 = vmatpush1.msra.mxu0 0.0
    %1782 = vmatprep.subr.mxu0 0.0
    %1783 = vmatpush1.msra.mxu0 0.0
    %1784 = vmatprep.subr.mxu0 0.0
    %1785 = vmatpush1.msra.mxu0 0.0
    %1786 = vmatprep.subr.mxu0 %v1742
    %1787 = vmatpush1.msra.mxu0 %v1741
    %1788 = vmatprep.subr.mxu0 0.0
    %1789 = vmatpush2.msra.mxu0 0.0
    %1790 = vmatprep.subr.mxu0 0.0
    %1791 = vmatpush2.msra.mxu0 0.0
    %1792 = vmatprep.subr.mxu0 0.0
    %1793 = vmatpush2.msra.mxu0 0.0
    %1794 = vmatprep.subr.mxu0 0.0
    %1795 = vmatpush2.msra.mxu0 0.0
    %1796 = vmatprep.subr.mxu0 0.0
    %1797 = vmatpush2.msra.mxu0 0.0
    %1798 = vmatprep.subr.mxu0 0.0
    %1799 = vmatpush2.msra.mxu0 0.0
    %1800 = vmatprep.subr.mxu0 0.0
    %1801 = vmatpush2.msra.mxu0 0.0
    %1802 = vmatprep.subr.mxu0 0.0
    %1803 = vmatpush2.msra.mxu0 0.0
    %1804 = vmatprep.subr.mxu0 0.0
    %1805 = vmatpush2.msra.mxu0 0.0
    %1806 = vmatprep.subr.mxu0 0.0
    %1807 = vmatpush2.msra.mxu0 0.0
    %1808 = vmatprep.subr.mxu0 0.0
    %1809 = vmatpush2.msra.mxu0 0.0
    %1810 = vmatprep.subr.mxu0 0.0
    %1811 = vmatpush2.msra.mxu0 0.0
    %1812 = vmatprep.subr.mxu0 0.0
    %1813 = vmatpush2.msra.mxu0 0.0
    %1814 = vmatprep.subr.mxu0 0.0
    %1815 = vmatpush2.msra.mxu0 0.0
    %1816 = vmatprep.subr.mxu0 0.0
    %1817 = vmatpush2.msra.mxu0 0.0
    %1818 = vmatprep.subr.mxu0 0.0
    %1819 = vmatpush2.msra.mxu0 0.0
    %1820 = vmatprep.mubr.f32.mxu0 0.0
    %1821 = vmatmul.mubr.f32.gmra.mxu0 %v1754
    %v1822 = vpop.f32.mrf.mxu0
    %v1823 = vadd.f32 0.0, %v1822
    %v1824 = vpop.f32.mrf.mxu0
    %v1825 = vadd.f32 0.0, %v1824
    %1826 = vdwg.mxu0
    %1827 = vmatprep.subr.mxu0 0.0
    %1828 = vmatpush1.msra.mxu0 0.0
    %1829 = vmatprep.subr.mxu0 0.0
    %1830 = vmatpush1.msra.mxu0 0.0
    %1831 = vmatprep.subr.mxu0 0.0
    %1832 = vmatpush1.msra.mxu0 0.0
    %1833 = vmatprep.subr.mxu0 0.0
    %1834 = vmatpush1.msra.mxu0 0.0
    %1835 = vmatprep.subr.mxu0 0.0
    %1836 = vmatpush1.msra.mxu0 0.0
    %1837 = vmatprep.subr.mxu0 0.0
    %1838 = vmatpush1.msra.mxu0 0.0
    %1839 = vmatprep.subr.mxu0 0.0
    %1840 = vmatpush1.msra.mxu0 0.0
    %1841 = vmatprep.subr.mxu0 0.0
    %1842 = vmatpush1.msra.mxu0 0.0
    %1843 = vmatprep.subr.mxu0 0.0
    %1844 = vmatpush1.msra.mxu0 0.0
    %1845 = vmatprep.subr.mxu0 0.0
    %1846 = vmatpush1.msra.mxu0 0.0
    %1847 = vmatprep.subr.mxu0 0.0
    %1848 = vmatpush1.msra.mxu0 0.0
    %1849 = vmatprep.subr.mxu0 0.0
    %1850 = vmatpush1.msra.mxu0 0.0
    %1851 = vmatprep.subr.mxu0 0.0
    %1852 = vmatpush1.msra.mxu0 0.0
    %1853 = vmatprep.subr.mxu0 0.0
    %1854 = vmatpush1.msra.mxu0 0.0
    %1855 = vmatprep.subr.mxu0 0.0
    %1856 = vmatpush1.msra.mxu0 0.0
    %1857 = vmatprep.subr.mxu0 %v1744
    %1858 = vmatpush1.msra.mxu0 %v1743
    %1859 = vmatprep.subr.mxu0 0.0
    %1860 = vmatpush2.msra.mxu0 0.0
    %1861 = vmatprep.subr.mxu0 0.0
    %1862 = vmatpush2.msra.mxu0 0.0
    %1863 = vmatprep.subr.mxu0 0.0
    %1864 = vmatpush2.msra.mxu0 0.0
    %1865 = vmatprep.subr.mxu0 0.0
    %1866 = vmatpush2.msra.mxu0 0.0
    %1867 = vmatprep.subr.mxu0 0.0
    %1868 = vmatpush2.msra.mxu0 0.0
    %1869 = vmatprep.subr.mxu0 0.0
    %1870 = vmatpush2.msra.mxu0 0.0
    %1871 = vmatprep.subr.mxu0 0.0
    %1872 = vmatpush2.msra.mxu0 0.0
    %1873 = vmatprep.subr.mxu0 0.0
    %1874 = vmatpush2.msra.mxu0 0.0
    %1875 = vmatprep.subr.mxu0 0.0
    %1876 = vmatpush2.msra.mxu0 0.0
    %1877 = vmatprep.subr.mxu0 0.0
    %1878 = vmatpush2.msra.mxu0 0.0
    %1879 = vmatprep.subr.mxu0 0.0
    %1880 = vmatpush2.msra.mxu0 0.0
    %1881 = vmatprep.subr.mxu0 0.0
    %1882 = vmatpush2.msra.mxu0 0.0
    %1883 = vmatprep.subr.mxu0 0.0
    %1884 = vmatpush2.msra.mxu0 0.0
    %1885 = vmatprep.subr.mxu0 0.0
    %1886 = vmatpush2.msra.mxu0 0.0
    %1887 = vmatprep.subr.mxu0 0.0
    %1888 = vmatpush2.msra.mxu0 0.0
    %1889 = vmatprep.subr.mxu0 0.0
    %1890 = vmatpush2.msra.mxu0 0.0
    %1891 = vmatprep.mubr.f32.mxu0 0.0
    %1892 = vmatmul.mubr.f32.gmra.mxu0 %v1754
    %v1893 = vpop.f32.mrf.mxu0
    %v1894 = vadd.f32 0.0, %v1893
    %v1895 = vpop.f32.mrf.mxu0
    %v1896 = vadd.f32 0.0, %v1895
    %1897 = vdwg.mxu0
    %1898 = vmatprep.subr.mxu0 0.0
    %1899 = vmatpush1.msra.mxu0 0.0
    %1900 = vmatprep.subr.mxu0 0.0
    %1901 = vmatpush1.msra.mxu0 0.0
    %1902 = vmatprep.subr.mxu0 0.0
    %1903 = vmatpush1.msra.mxu0 0.0
    %1904 = vmatprep.subr.mxu0 0.0
    %1905 = vmatpush1.msra.mxu0 0.0
    %1906 = vmatprep.subr.mxu0 0.0
    %1907 = vmatpush1.msra.mxu0 0.0
    %1908 = vmatprep.subr.mxu0 0.0
    %1909 = vmatpush1.msra.mxu0 0.0
    %1910 = vmatprep.subr.mxu0 0.0
    %1911 = vmatpush1.msra.mxu0 0.0
    %1912 = vmatprep.subr.mxu0 0.0
    %1913 = vmatpush1.msra.mxu0 0.0
    %1914 = vmatprep.subr.mxu0 0.0
    %1915 = vmatpush1.msra.mxu0 0.0
    %1916 = vmatprep.subr.mxu0 0.0
    %1917 = vmatpush1.msra.mxu0 0.0
    %1918 = vmatprep.subr.mxu0 0.0
    %1919 = vmatpush1.msra.mxu0 0.0
    %1920 = vmatprep.subr.mxu0 0.0
    %1921 = vmatpush1.msra.mxu0 0.0
    %1922 = vmatprep.subr.mxu0 0.0
    %1923 = vmatpush1.msra.mxu0 0.0
    %1924 = vmatprep.subr.mxu0 0.0
    %1925 = vmatpush1.msra.mxu0 0.0
    %1926 = vmatprep.subr.mxu0 0.0
    %1927 = vmatpush1.msra.mxu0 0.0
    %1928 = vmatprep.subr.mxu0 %v1746
    %1929 = vmatpush1.msra.mxu0 %v1745
    %1930 = vmatprep.subr.mxu0 0.0
    %1931 = vmatpush2.msra.mxu0 0.0
    %1932 = vmatprep.subr.mxu0 0.0
    %1933 = vmatpush2.msra.mxu0 0.0
    %1934 = vmatprep.subr.mxu0 0.0
    %1935 = vmatpush2.msra.mxu0 0.0
    %1936 = vmatprep.subr.mxu0 0.0
    %1937 = vmatpush2.msra.mxu0 0.0
    %1938 = vmatprep.subr.mxu0 0.0
    %1939 = vmatpush2.msra.mxu0 0.0
    %1940 = vmatprep.subr.mxu0 0.0
    %1941 = vmatpush2.msra.mxu0 0.0
    %1942 = vmatprep.subr.mxu0 0.0
    %1943 = vmatpush2.msra.mxu0 0.0
    %1944 = vmatprep.subr.mxu0 0.0
    %1945 = vmatpush2.msra.mxu0 0.0
    %1946 = vmatprep.subr.mxu0 0.0
    %1947 = vmatpush2.msra.mxu0 0.0
    %1948 = vmatprep.subr.mxu0 0.0
    %1949 = vmatpush2.msra.mxu0 0.0
    %1950 = vmatprep.subr.mxu0 0.0
    %1951 = vmatpush2.msra.mxu0 0.0
    %1952 = vmatprep.subr.mxu0 0.0
    %1953 = vmatpush2.msra.mxu0 0.0
    %1954 = vmatprep.subr.mxu0 0.0
    %1955 = vmatpush2.msra.mxu0 0.0
    %1956 = vmatprep.subr.mxu0 0.0
    %1957 = vmatpush2.msra.mxu0 0.0
    %1958 = vmatprep.subr.mxu0 0.0
    %1959 = vmatpush2.msra.mxu0 0.0
    %1960 = vmatprep.subr.mxu0 0.0
    %1961 = vmatpush2.msra.mxu0 0.0
    %1962 = vmatprep.mubr.f32.mxu0 0.0
    %1963 = vmatmul.mubr.f32.gmra.mxu0 %v1754
    %v1964 = vpop.f32.mrf.mxu0
    %v1965 = vadd.f32 0.0, %v1964
    %v1966 = vpop.f32.mrf.mxu0
    %v1967 = vadd.f32 0.0, %v1966
    %1968 = vdwg.mxu0
    %v1969 = vadd.f32 %v1718, %v1823
    %v1970 = vadd.f32 %v1719, %v1825
    %v1971 = vadd.f32 %v1720, %v1894
    %v1972 = vadd.f32 %v1721, %v1896
    %v1973 = vadd.f32 %v1722, %v1965
    %v1974 = vadd.f32 %v1723, %v1967
    %s1975 = scalar_lea.vmem %s1, 56
    %v1976 = vld [vmem:[%s1975] sm:$0xff]
    %1977 = vrot.lane.b32.xlu0 %v244, 91
    %v1978 = vpop.permute.xlu0 %1977
    %1979 = vrot.lane.b32.xlu0 %v245, 91
    %v1980 = vpop.permute.xlu0 %1979
    %1981 = vrot.lane.b32.xlu0 %v246, 91
    %v1982 = vpop.permute.xlu0 %1981
    %1983 = vrot.lane.b32.xlu0 %v247, 91
    %v1984 = vpop.permute.xlu0 %1983
    %1985 = vrot.lane.b32.xlu0 %v248, 91
    %v1986 = vpop.permute.xlu0 %1985
    %1987 = vrot.lane.b32.xlu0 %v249, 91
    %v1988 = vpop.permute.xlu0 %1987
    %1989 = vrot.lane.b32.xlu0 %v250, 91
    %v1990 = vpop.permute.xlu0 %1989
    %vm1991 = vcmask 744448
    %v1992 = vsel %vm1991, %v1978, %v1980
    %v1993 = vsel %vm1991, %v1980, %v1982
    %v1994 = vsel %vm1991, %v1982, %v1984
    %v1995 = vsel %vm1991, %v1984, %v1986
    %v1996 = vsel %vm1991, %v1986, %v1988
    %v1997 = vsel %vm1991, %v1988, %v1990
    %v2005 = vsel %vm287, %v1976, 0
    %2007 = vmatprep.subr.mxu0 0.0
    %2008 = vmatpush1.msra.mxu0 0.0
    %2009 = vmatprep.subr.mxu0 0.0
    %2010 = vmatpush1.msra.mxu0 0.0
    %2011 = vmatprep.subr.mxu0 0.0
    %2012 = vmatpush1.msra.mxu0 0.0
    %2013 = vmatprep.subr.mxu0 0.0
    %2014 = vmatpush1.msra.mxu0 0.0
    %2015 = vmatprep.subr.mxu0 0.0
    %2016 = vmatpush1.msra.mxu0 0.0
    %2017 = vmatprep.subr.mxu0 0.0
    %2018 = vmatpush1.msra.mxu0 0.0
    %2019 = vmatprep.subr.mxu0 0.0
    %2020 = vmatpush1.msra.mxu0 0.0
    %2021 = vmatprep.subr.mxu0 0.0
    %2022 = vmatpush1.msra.mxu0 0.0
    %2023 = vmatprep.subr.mxu0 0.0
    %2024 = vmatpush1.msra.mxu0 0.0
    %2025 = vmatprep.subr.mxu0 0.0
    %2026 = vmatpush1.msra.mxu0 0.0
    %2027 = vmatprep.subr.mxu0 0.0
    %2028 = vmatpush1.msra.mxu0 0.0
    %2029 = vmatprep.subr.mxu0 0.0
    %2030 = vmatpush1.msra.mxu0 0.0
    %2031 = vmatprep.subr.mxu0 0.0
    %2032 = vmatpush1.msra.mxu0 0.0
    %2033 = vmatprep.subr.mxu0 0.0
    %2034 = vmatpush1.msra.mxu0 0.0
    %2035 = vmatprep.subr.mxu0 0.0
    %2036 = vmatpush1.msra.mxu0 0.0
    %2037 = vmatprep.subr.mxu0 %v1993
    %2038 = vmatpush1.msra.mxu0 %v1992
    %2039 = vmatprep.subr.mxu0 0.0
    %2040 = vmatpush2.msra.mxu0 0.0
    %2041 = vmatprep.subr.mxu0 0.0
    %2042 = vmatpush2.msra.mxu0 0.0
    %2043 = vmatprep.subr.mxu0 0.0
    %2044 = vmatpush2.msra.mxu0 0.0
    %2045 = vmatprep.subr.mxu0 0.0
    %2046 = vmatpush2.msra.mxu0 0.0
    %2047 = vmatprep.subr.mxu0 0.0
    %2048 = vmatpush2.msra.mxu0 0.0
    %2049 = vmatprep.subr.mxu0 0.0
    %2050 = vmatpush2.msra.mxu0 0.0
    %2051 = vmatprep.subr.mxu0 0.0
    %2052 = vmatpush2.msra.mxu0 0.0
    %2053 = vmatprep.subr.mxu0 0.0
    %2054 = vmatpush2.msra.mxu0 0.0
    %2055 = vmatprep.subr.mxu0 0.0
    %2056 = vmatpush2.msra.mxu0 0.0
    %2057 = vmatprep.subr.mxu0 0.0
    %2058 = vmatpush2.msra.mxu0 0.0
    %2059 = vmatprep.subr.mxu0 0.0
    %2060 = vmatpush2.msra.mxu0 0.0
    %2061 = vmatprep.subr.mxu0 0.0
    %2062 = vmatpush2.msra.mxu0 0.0
    %2063 = vmatprep.subr.mxu0 0.0
    %2064 = vmatpush2.msra.mxu0 0.0
    %2065 = vmatprep.subr.mxu0 0.0
    %2066 = vmatpush2.msra.mxu0 0.0
    %2067 = vmatprep.subr.mxu0 0.0
    %2068 = vmatpush2.msra.mxu0 0.0
    %2069 = vmatprep.subr.mxu0 0.0
    %2070 = vmatpush2.msra.mxu0 0.0
    %2071 = vmatprep.mubr.f32.mxu0 0.0
    %2072 = vmatmul.mubr.f32.gmra.mxu0 %v2005
    %v2073 = vpop.f32.mrf.mxu0
    %v2074 = vadd.f32 0.0, %v2073
    %v2075 = vpop.f32.mrf.mxu0
    %v2076 = vadd.f32 0.0, %v2075
    %2077 = vdwg.mxu0
    %2078 = vmatprep.subr.mxu0 0.0
    %2079 = vmatpush1.msra.mxu0 0.0
    %2080 = vmatprep.subr.mxu0 0.0
    %2081 = vmatpush1.msra.mxu0 0.0
    %2082 = vmatprep.subr.mxu0 0.0
    %2083 = vmatpush1.msra.mxu0 0.0
    %2084 = vmatprep.subr.mxu0 0.0
    %2085 = vmatpush1.msra.mxu0 0.0
    %2086 = vmatprep.subr.mxu0 0.0
    %2087 = vmatpush1.msra.mxu0 0.0
    %2088 = vmatprep.subr.mxu0 0.0
    %2089 = vmatpush1.msra.mxu0 0.0
    %2090 = vmatprep.subr.mxu0 0.0
    %2091 = vmatpush1.msra.mxu0 0.0
    %2092 = vmatprep.subr.mxu0 0.0
    %2093 = vmatpush1.msra.mxu0 0.0
    %2094 = vmatprep.subr.mxu0 0.0
    %2095 = vmatpush1.msra.mxu0 0.0
    %2096 = vmatprep.subr.mxu0 0.0
    %2097 = vmatpush1.msra.mxu0 0.0
    %2098 = vmatprep.subr.mxu0 0.0
    %2099 = vmatpush1.msra.mxu0 0.0
    %2100 = vmatprep.subr.mxu0 0.0
    %2101 = vmatpush1.msra.mxu0 0.0
    %2102 = vmatprep.subr.mxu0 0.0
    %2103 = vmatpush1.msra.mxu0 0.0
    %2104 = vmatprep.subr.mxu0 0.0
    %2105 = vmatpush1.msra.mxu0 0.0
    %2106 = vmatprep.subr.mxu0 0.0
    %2107 = vmatpush1.msra.mxu0 0.0
    %2108 = vmatprep.subr.mxu0 %v1995
    %2109 = vmatpush1.msra.mxu0 %v1994
    %2110 = vmatprep.subr.mxu0 0.0
    %2111 = vmatpush2.msra.mxu0 0.0
    %2112 = vmatprep.subr.mxu0 0.0
    %2113 = vmatpush2.msra.mxu0 0.0
    %2114 = vmatprep.subr.mxu0 0.0
    %2115 = vmatpush2.msra.mxu0 0.0
    %2116 = vmatprep.subr.mxu0 0.0
    %2117 = vmatpush2.msra.mxu0 0.0
    %2118 = vmatprep.subr.mxu0 0.0
    %2119 = vmatpush2.msra.mxu0 0.0
    %2120 = vmatprep.subr.mxu0 0.0
    %2121 = vmatpush2.msra.mxu0 0.0
    %2122 = vmatprep.subr.mxu0 0.0
    %2123 = vmatpush2.msra.mxu0 0.0
    %2124 = vmatprep.subr.mxu0 0.0
    %2125 = vmatpush2.msra.mxu0 0.0
    %2126 = vmatprep.subr.mxu0 0.0
    %2127 = vmatpush2.msra.mxu0 0.0
    %2128 = vmatprep.subr.mxu0 0.0
    %2129 = vmatpush2.msra.mxu0 0.0
    %2130 = vmatprep.subr.mxu0 0.0
    %2131 = vmatpush2.msra.mxu0 0.0
    %2132 = vmatprep.subr.mxu0 0.0
    %2133 = vmatpush2.msra.mxu0 0.0
    %2134 = vmatprep.subr.mxu0 0.0
    %2135 = vmatpush2.msra.mxu0 0.0
    %2136 = vmatprep.subr.mxu0 0.0
    %2137 = vmatpush2.msra.mxu0 0.0
    %2138 = vmatprep.subr.mxu0 0.0
    %2139 = vmatpush2.msra.mxu0 0.0
    %2140 = vmatprep.subr.mxu0 0.0
    %2141 = vmatpush2.msra.mxu0 0.0
    %2142 = vmatprep.mubr.f32.mxu0 0.0
    %2143 = vmatmul.mubr.f32.gmra.mxu0 %v2005
    %v2144 = vpop.f32.mrf.mxu0
    %v2145 = vadd.f32 0.0, %v2144
    %v2146 = vpop.f32.mrf.mxu0
    %v2147 = vadd.f32 0.0, %v2146
    %2148 = vdwg.mxu0
    %2149 = vmatprep.subr.mxu0 0.0
    %2150 = vmatpush1.msra.mxu0 0.0
    %2151 = vmatprep.subr.mxu0 0.0
    %2152 = vmatpush1.msra.mxu0 0.0
    %2153 = vmatprep.subr.mxu0 0.0
    %2154 = vmatpush1.msra.mxu0 0.0
    %2155 = vmatprep.subr.mxu0 0.0
    %2156 = vmatpush1.msra.mxu0 0.0
    %2157 = vmatprep.subr.mxu0 0.0
    %2158 = vmatpush1.msra.mxu0 0.0
    %2159 = vmatprep.subr.mxu0 0.0
    %2160 = vmatpush1.msra.mxu0 0.0
    %2161 = vmatprep.subr.mxu0 0.0
    %2162 = vmatpush1.msra.mxu0 0.0
    %2163 = vmatprep.subr.mxu0 0.0
    %2164 = vmatpush1.msra.mxu0 0.0
    %2165 = vmatprep.subr.mxu0 0.0
    %2166 = vmatpush1.msra.mxu0 0.0
    %2167 = vmatprep.subr.mxu0 0.0
    %2168 = vmatpush1.msra.mxu0 0.0
    %2169 = vmatprep.subr.mxu0 0.0
    %2170 = vmatpush1.msra.mxu0 0.0
    %2171 = vmatprep.subr.mxu0 0.0
    %2172 = vmatpush1.msra.mxu0 0.0
    %2173 = vmatprep.subr.mxu0 0.0
    %2174 = vmatpush1.msra.mxu0 0.0
    %2175 = vmatprep.subr.mxu0 0.0
    %2176 = vmatpush1.msra.mxu0 0.0
    %2177 = vmatprep.subr.mxu0 0.0
    %2178 = vmatpush1.msra.mxu0 0.0
    %2179 = vmatprep.subr.mxu0 %v1997
    %2180 = vmatpush1.msra.mxu0 %v1996
    %2181 = vmatprep.subr.mxu0 0.0
    %2182 = vmatpush2.msra.mxu0 0.0
    %2183 = vmatprep.subr.mxu0 0.0
    %2184 = vmatpush2.msra.mxu0 0.0
    %2185 = vmatprep.subr.mxu0 0.0
    %2186 = vmatpush2.msra.mxu0 0.0
    %2187 = vmatprep.subr.mxu0 0.0
    %2188 = vmatpush2.msra.mxu0 0.0
    %2189 = vmatprep.subr.mxu0 0.0
    %2190 = vmatpush2.msra.mxu0 0.0
    %2191 = vmatprep.subr.mxu0 0.0
    %2192 = vmatpush2.msra.mxu0 0.0
    %2193 = vmatprep.subr.mxu0 0.0
    %2194 = vmatpush2.msra.mxu0 0.0
    %2195 = vmatprep.subr.mxu0 0.0
    %2196 = vmatpush2.msra.mxu0 0.0
    %2197 = vmatprep.subr.mxu0 0.0
    %2198 = vmatpush2.msra.mxu0 0.0
    %2199 = vmatprep.subr.mxu0 0.0
    %2200 = vmatpush2.msra.mxu0 0.0
    %2201 = vmatprep.subr.mxu0 0.0
    %2202 = vmatpush2.msra.mxu0 0.0
    %2203 = vmatprep.subr.mxu0 0.0
    %2204 = vmatpush2.msra.mxu0 0.0
    %2205 = vmatprep.subr.mxu0 0.0
    %2206 = vmatpush2.msra.mxu0 0.0
    %2207 = vmatprep.subr.mxu0 0.0
    %2208 = vmatpush2.msra.mxu0 0.0
    %2209 = vmatprep.subr.mxu0 0.0
    %2210 = vmatpush2.msra.mxu0 0.0
    %2211 = vmatprep.subr.mxu0 0.0
    %2212 = vmatpush2.msra.mxu0 0.0
    %2213 = vmatprep.mubr.f32.mxu0 0.0
    %2214 = vmatmul.mubr.f32.gmra.mxu0 %v2005
    %v2215 = vpop.f32.mrf.mxu0
    %v2216 = vadd.f32 0.0, %v2215
    %v2217 = vpop.f32.mrf.mxu0
    %v2218 = vadd.f32 0.0, %v2217
    %2219 = vdwg.mxu0
    %v2220 = vadd.f32 %v1969, %v2074
    %v2221 = vadd.f32 %v1970, %v2076
    %v2222 = vadd.f32 %v1971, %v2145
    %v2223 = vadd.f32 %v1972, %v2147
    %v2224 = vadd.f32 %v1973, %v2216
    %v2225 = vadd.f32 %v1974, %v2218
    %s2226 = scalar_lea.vmem %s1, 64
    %v2227 = vld [vmem:[%s2226] sm:$0xff]
    %2228 = vrot.lane.b32.xlu0 %v244, 90
    %v2229 = vpop.permute.xlu0 %2228
    %2230 = vrot.lane.b32.xlu0 %v245, 90
    %v2231 = vpop.permute.xlu0 %2230
    %2232 = vrot.lane.b32.xlu0 %v246, 90
    %v2233 = vpop.permute.xlu0 %2232
    %2234 = vrot.lane.b32.xlu0 %v247, 90
    %v2235 = vpop.permute.xlu0 %2234
    %2236 = vrot.lane.b32.xlu0 %v248, 90
    %v2237 = vpop.permute.xlu0 %2236
    %2238 = vrot.lane.b32.xlu0 %v249, 90
    %v2239 = vpop.permute.xlu0 %2238
    %2240 = vrot.lane.b32.xlu0 %v250, 90
    %v2241 = vpop.permute.xlu0 %2240
    %vm2242 = vcmask 736256
    %v2243 = vsel %vm2242, %v2229, %v2231
    %v2244 = vsel %vm2242, %v2231, %v2233
    %v2245 = vsel %vm2242, %v2233, %v2235
    %v2246 = vsel %vm2242, %v2235, %v2237
    %v2247 = vsel %vm2242, %v2237, %v2239
    %v2248 = vsel %vm2242, %v2239, %v2241
    %v2256 = vsel %vm287, %v2227, 0
    %2258 = vmatprep.subr.mxu0 0.0
    %2259 = vmatpush1.msra.mxu0 0.0
    %2260 = vmatprep.subr.mxu0 0.0
    %2261 = vmatpush1.msra.mxu0 0.0
    %2262 = vmatprep.subr.mxu0 0.0
    %2263 = vmatpush1.msra.mxu0 0.0
    %2264 = vmatprep.subr.mxu0 0.0
    %2265 = vmatpush1.msra.mxu0 0.0
    %2266 = vmatprep.subr.mxu0 0.0
    %2267 = vmatpush1.msra.mxu0 0.0
    %2268 = vmatprep.subr.mxu0 0.0
    %2269 = vmatpush1.msra.mxu0 0.0
    %2270 = vmatprep.subr.mxu0 0.0
    %2271 = vmatpush1.msra.mxu0 0.0
    %2272 = vmatprep.subr.mxu0 0.0
    %2273 = vmatpush1.msra.mxu0 0.0
    %2274 = vmatprep.subr.mxu0 0.0
    %2275 = vmatpush1.msra.mxu0 0.0
    %2276 = vmatprep.subr.mxu0 0.0
    %2277 = vmatpush1.msra.mxu0 0.0
    %2278 = vmatprep.subr.mxu0 0.0
    %2279 = vmatpush1.msra.mxu0 0.0
    %2280 = vmatprep.subr.mxu0 0.0
    %2281 = vmatpush1.msra.mxu0 0.0
    %2282 = vmatprep.subr.mxu0 0.0
    %2283 = vmatpush1.msra.mxu0 0.0
    %2284 = vmatprep.subr.mxu0 0.0
    %2285 = vmatpush1.msra.mxu0 0.0
    %2286 = vmatprep.subr.mxu0 0.0
    %2287 = vmatpush1.msra.mxu0 0.0
    %2288 = vmatprep.subr.mxu0 %v2244
    %2289 = vmatpush1.msra.mxu0 %v2243
    %2290 = vmatprep.subr.mxu0 0.0
    %2291 = vmatpush2.msra.mxu0 0.0
    %2292 = vmatprep.subr.mxu0 0.0
    %2293 = vmatpush2.msra.mxu0 0.0
    %2294 = vmatprep.subr.mxu0 0.0
    %2295 = vmatpush2.msra.mxu0 0.0
    %2296 = vmatprep.subr.mxu0 0.0
    %2297 = vmatpush2.msra.mxu0 0.0
    %2298 = vmatprep.subr.mxu0 0.0
    %2299 = vmatpush2.msra.mxu0 0.0
    %2300 = vmatprep.subr.mxu0 0.0
    %2301 = vmatpush2.msra.mxu0 0.0
    %2302 = vmatprep.subr.mxu0 0.0
    %2303 = vmatpush2.msra.mxu0 0.0
    %2304 = vmatprep.subr.mxu0 0.0
    %2305 = vmatpush2.msra.mxu0 0.0
    %2306 = vmatprep.subr.mxu0 0.0
    %2307 = vmatpush2.msra.mxu0 0.0
    %2308 = vmatprep.subr.mxu0 0.0
    %2309 = vmatpush2.msra.mxu0 0.0
    %2310 = vmatprep.subr.mxu0 0.0
    %2311 = vmatpush2.msra.mxu0 0.0
    %2312 = vmatprep.subr.mxu0 0.0
    %2313 = vmatpush2.msra.mxu0 0.0
    %2314 = vmatprep.subr.mxu0 0.0
    %2315 = vmatpush2.msra.mxu0 0.0
    %2316 = vmatprep.subr.mxu0 0.0
    %2317 = vmatpush2.msra.mxu0 0.0
    %2318 = vmatprep.subr.mxu0 0.0
    %2319 = vmatpush2.msra.mxu0 0.0
    %2320 = vmatprep.subr.mxu0 0.0
    %2321 = vmatpush2.msra.mxu0 0.0
    %2322 = vmatprep.mubr.f32.mxu0 0.0
    %2323 = vmatmul.mubr.f32.gmra.mxu0 %v2256
    %v2324 = vpop.f32.mrf.mxu0
    %v2325 = vadd.f32 0.0, %v2324
    %v2326 = vpop.f32.mrf.mxu0
    %v2327 = vadd.f32 0.0, %v2326
    %2328 = vdwg.mxu0
    %2329 = vmatprep.subr.mxu0 0.0
    %2330 = vmatpush1.msra.mxu0 0.0
    %2331 = vmatprep.subr.mxu0 0.0
    %2332 = vmatpush1.msra.mxu0 0.0
    %2333 = vmatprep.subr.mxu0 0.0
    %2334 = vmatpush1.msra.mxu0 0.0
    %2335 = vmatprep.subr.mxu0 0.0
    %2336 = vmatpush1.msra.mxu0 0.0
    %2337 = vmatprep.subr.mxu0 0.0
    %2338 = vmatpush1.msra.mxu0 0.0
    %2339 = vmatprep.subr.mxu0 0.0
    %2340 = vmatpush1.msra.mxu0 0.0
    %2341 = vmatprep.subr.mxu0 0.0
    %2342 = vmatpush1.msra.mxu0 0.0
    %2343 = vmatprep.subr.mxu0 0.0
    %2344 = vmatpush1.msra.mxu0 0.0
    %2345 = vmatprep.subr.mxu0 0.0
    %2346 = vmatpush1.msra.mxu0 0.0
    %2347 = vmatprep.subr.mxu0 0.0
    %2348 = vmatpush1.msra.mxu0 0.0
    %2349 = vmatprep.subr.mxu0 0.0
    %2350 = vmatpush1.msra.mxu0 0.0
    %2351 = vmatprep.subr.mxu0 0.0
    %2352 = vmatpush1.msra.mxu0 0.0
    %2353 = vmatprep.subr.mxu0 0.0
    %2354 = vmatpush1.msra.mxu0 0.0
    %2355 = vmatprep.subr.mxu0 0.0
    %2356 = vmatpush1.msra.mxu0 0.0
    %2357 = vmatprep.subr.mxu0 0.0
    %2358 = vmatpush1.msra.mxu0 0.0
    %2359 = vmatprep.subr.mxu0 %v2246
    %2360 = vmatpush1.msra.mxu0 %v2245
    %2361 = vmatprep.subr.mxu0 0.0
    %2362 = vmatpush2.msra.mxu0 0.0
    %2363 = vmatprep.subr.mxu0 0.0
    %2364 = vmatpush2.msra.mxu0 0.0
    %2365 = vmatprep.subr.mxu0 0.0
    %2366 = vmatpush2.msra.mxu0 0.0
    %2367 = vmatprep.subr.mxu0 0.0
    %2368 = vmatpush2.msra.mxu0 0.0
    %2369 = vmatprep.subr.mxu0 0.0
    %2370 = vmatpush2.msra.mxu0 0.0
    %2371 = vmatprep.subr.mxu0 0.0
    %2372 = vmatpush2.msra.mxu0 0.0
    %2373 = vmatprep.subr.mxu0 0.0
    %2374 = vmatpush2.msra.mxu0 0.0
    %2375 = vmatprep.subr.mxu0 0.0
    %2376 = vmatpush2.msra.mxu0 0.0
    %2377 = vmatprep.subr.mxu0 0.0
    %2378 = vmatpush2.msra.mxu0 0.0
    %2379 = vmatprep.subr.mxu0 0.0
    %2380 = vmatpush2.msra.mxu0 0.0
    %2381 = vmatprep.subr.mxu0 0.0
    %2382 = vmatpush2.msra.mxu0 0.0
    %2383 = vmatprep.subr.mxu0 0.0
    %2384 = vmatpush2.msra.mxu0 0.0
    %2385 = vmatprep.subr.mxu0 0.0
    %2386 = vmatpush2.msra.mxu0 0.0
    %2387 = vmatprep.subr.mxu0 0.0
    %2388 = vmatpush2.msra.mxu0 0.0
    %2389 = vmatprep.subr.mxu0 0.0
    %2390 = vmatpush2.msra.mxu0 0.0
    %2391 = vmatprep.subr.mxu0 0.0
    %2392 = vmatpush2.msra.mxu0 0.0
    %2393 = vmatprep.mubr.f32.mxu0 0.0
    %2394 = vmatmul.mubr.f32.gmra.mxu0 %v2256
    %v2395 = vpop.f32.mrf.mxu0
    %v2396 = vadd.f32 0.0, %v2395
    %v2397 = vpop.f32.mrf.mxu0
    %v2398 = vadd.f32 0.0, %v2397
    %2399 = vdwg.mxu0
    %2400 = vmatprep.subr.mxu0 0.0
    %2401 = vmatpush1.msra.mxu0 0.0
    %2402 = vmatprep.subr.mxu0 0.0
    %2403 = vmatpush1.msra.mxu0 0.0
    %2404 = vmatprep.subr.mxu0 0.0
    %2405 = vmatpush1.msra.mxu0 0.0
    %2406 = vmatprep.subr.mxu0 0.0
    %2407 = vmatpush1.msra.mxu0 0.0
    %2408 = vmatprep.subr.mxu0 0.0
    %2409 = vmatpush1.msra.mxu0 0.0
    %2410 = vmatprep.subr.mxu0 0.0
    %2411 = vmatpush1.msra.mxu0 0.0
    %2412 = vmatprep.subr.mxu0 0.0
    %2413 = vmatpush1.msra.mxu0 0.0
    %2414 = vmatprep.subr.mxu0 0.0
    %2415 = vmatpush1.msra.mxu0 0.0
    %2416 = vmatprep.subr.mxu0 0.0
    %2417 = vmatpush1.msra.mxu0 0.0
    %2418 = vmatprep.subr.mxu0 0.0
    %2419 = vmatpush1.msra.mxu0 0.0
    %2420 = vmatprep.subr.mxu0 0.0
    %2421 = vmatpush1.msra.mxu0 0.0
    %2422 = vmatprep.subr.mxu0 0.0
    %2423 = vmatpush1.msra.mxu0 0.0
    %2424 = vmatprep.subr.mxu0 0.0
    %2425 = vmatpush1.msra.mxu0 0.0
    %2426 = vmatprep.subr.mxu0 0.0
    %2427 = vmatpush1.msra.mxu0 0.0
    %2428 = vmatprep.subr.mxu0 0.0
    %2429 = vmatpush1.msra.mxu0 0.0
    %2430 = vmatprep.subr.mxu0 %v2248
    %2431 = vmatpush1.msra.mxu0 %v2247
    %2432 = vmatprep.subr.mxu0 0.0
    %2433 = vmatpush2.msra.mxu0 0.0
    %2434 = vmatprep.subr.mxu0 0.0
    %2435 = vmatpush2.msra.mxu0 0.0
    %2436 = vmatprep.subr.mxu0 0.0
    %2437 = vmatpush2.msra.mxu0 0.0
    %2438 = vmatprep.subr.mxu0 0.0
    %2439 = vmatpush2.msra.mxu0 0.0
    %2440 = vmatprep.subr.mxu0 0.0
    %2441 = vmatpush2.msra.mxu0 0.0
    %2442 = vmatprep.subr.mxu0 0.0
    %2443 = vmatpush2.msra.mxu0 0.0
    %2444 = vmatprep.subr.mxu0 0.0
    %2445 = vmatpush2.msra.mxu0 0.0
    %2446 = vmatprep.subr.mxu0 0.0
    %2447 = vmatpush2.msra.mxu0 0.0
    %2448 = vmatprep.subr.mxu0 0.0
    %2449 = vmatpush2.msra.mxu0 0.0
    %2450 = vmatprep.subr.mxu0 0.0
    %2451 = vmatpush2.msra.mxu0 0.0
    %2452 = vmatprep.subr.mxu0 0.0
    %2453 = vmatpush2.msra.mxu0 0.0
    %2454 = vmatprep.subr.mxu0 0.0
    %2455 = vmatpush2.msra.mxu0 0.0
    %2456 = vmatprep.subr.mxu0 0.0
    %2457 = vmatpush2.msra.mxu0 0.0
    %2458 = vmatprep.subr.mxu0 0.0
    %2459 = vmatpush2.msra.mxu0 0.0
    %2460 = vmatprep.subr.mxu0 0.0
    %2461 = vmatpush2.msra.mxu0 0.0
    %2462 = vmatprep.subr.mxu0 0.0
    %2463 = vmatpush2.msra.mxu0 0.0
    %2464 = vmatprep.mubr.f32.mxu0 0.0
    %2465 = vmatmul.mubr.f32.gmra.mxu0 %v2256
    %v2466 = vpop.f32.mrf.mxu0
    %v2467 = vadd.f32 0.0, %v2466
    %v2468 = vpop.f32.mrf.mxu0
    %v2469 = vadd.f32 0.0, %v2468
    %2470 = vdwg.mxu0
    %v2471 = vadd.f32 %v2220, %v2325
    %v2472 = vadd.f32 %v2221, %v2327
    %v2473 = vadd.f32 %v2222, %v2396
    %v2474 = vadd.f32 %v2223, %v2398
    %v2475 = vadd.f32 %v2224, %v2467
    %v2476 = vadd.f32 %v2225, %v2469
    %v2477 = vld [vmem:[%s2] sm:$0xff]
    %2479 = vset.pattern.permute.xlu0 0
    %2480 = vperm.xlu0 %2479, %v2477
    %v2481 = vpop.permute.xlu0 %2480
    %v2483 = vadd.f32 %v2471, %v2481
    %v2484 = vadd.f32 %v2472, %v2481
    %v2485 = vadd.f32 %v2473, %v2481
    %v2486 = vadd.f32 %v2474, %v2481
    %v2487 = vadd.f32 %v2475, %v2481
    %v2488 = vadd.f32 %v2476, %v2481
    %2489 = vst [vmem:[#allocation3] sm:$0xff] %v2483
    %2490 = vst [vmem:[#allocation3 + $0x8] sm:$0xff] %v2484
    %2491 = vst [vmem:[#allocation3 + $0x10] sm:$0xff] %v2485
    %s2492 = scalar_lea.vmem [#allocation3], 24
    %2493 = vst [vmem:[%s2492] sm:$0xff] %v2486
    %2494 = vst [vmem:[%s2492 + $0x8] sm:$0xff] %v2487
    %2495 = vst [vmem:[%s2492 + $0x10] sm:$0xff] %v2488
    // Predicated region
    $region14: #{tpu_custom_call.1} parent=1 // pred_check
      _
    $region15: #{tpu_custom_call.1} parent=1 // pred_check_branch
      %2497 = sbr.rel (0) target = $region17
    $region16: #{tpu_custom_call.1} parent=1 // pred_region
      %s2499 = ssub.s32 768, 768
      %2500 = vsyncadd [#allocation4], %s2499
      %s2501 = sshll.u32 [#allocation3], 4
      %s2502 = int_to_ptr.vmem [resolvable:$true] %s2501
      %2507 = dma.vmem_to_hbm [thread:$0]  %s2502, 768, %s3, [#allocation4], 384, 384, 24
    $region17: #{tpu_custom_call.1} parent=1 // pred_fallthru
      _
    // Predicated region
    $region18: #{tpu_custom_call.1} parent=1 // pred_check
      _
    $region19: #{tpu_custom_call.1} parent=1 // pred_check_branch
      %2509 = sbr.rel (0) target = $region21
    $region20: #{tpu_custom_call.1} parent=1 // pred_region
      %2510 = dma.done [#allocation4], 768
    $region21: #{tpu_custom_call.1} parent=1 // pred_fallthru
      _
    %2511 = vsyncpa [#allocation4], 1

</llo_original>
